<compile_context>
chip_gen: v7x
topology: tpu7x:2x2x1
jax: 0.10.0
libtpu: 0.0.40
codegen_flags: <defaults>
</compile_context>

<pallas_src>
import math
import functools

import jax
import jax.numpy as jnp
from jax.experimental import pallas as pl
from jax.experimental.pallas import tpu as pltpu


def _mha_kernel(num_heads, B, Lq, Lk,
                q_ref, k_ref, v_ref,
                wq_ref, bq_ref, wk_ref, bk_ref, wv_ref, bv_ref,
                wo_ref, bo_ref,
                o_ref):
    """Fused MHA forward; all activations arrive flattened to 2-D [rows, feat].

    q_ref:  [B*Lq, Dq]  (mxu dtype)   wq_ref: [Dq, Dm]  (mxu dtype, pre-scaled by 1/sqrt(d_k))
    k_ref:  [B*Lk, Dt]  (mxu dtype)   wk_ref: [Dt, Dm]
    v_ref:  [B*Lk, Dt]  (mxu dtype)   wv_ref: [Dt, Dm]
    wo_ref: [Dm, Dp]    (Dp = d_model padded up to a multiple of 128 lanes)
    b*_ref: [1, Dm] / [1, Dp]  (f32)  o_ref:  [B*Lq, Dp]  (f32)
    """
    Dm = wq_ref.shape[1]
    Dp = wo_ref.shape[1]
    d_k = Dm // num_heads
    mxu_dtype = wq_ref.dtype

    # ---- fused projections: full-width (N = d_model) matmuls, low-precision
    # ---- MXU operands, f32 accumulation; bias adds in f32.
    qp = jnp.dot(q_ref[...], wq_ref[...], preferred_element_type=jnp.float32) + bq_ref[...]
    kp = jnp.dot(k_ref[...], wk_ref[...], preferred_element_type=jnp.float32) + bk_ref[...]
    vp = jnp.dot(v_ref[...], wv_ref[...], preferred_element_type=jnp.float32) + bv_ref[...]

    # Un-flatten the batch dim for the single-batch-dim attention einsums.
    # f32 rows are sublane-tiled in groups of 8 and Lq/Lk are multiples of 8
    # here, so these reshapes are layout-trivial; the cast happens afterwards.
    qp3 = qp.reshape(B, Lq, Dm).astype(mxu_dtype)
    kp3 = kp.reshape(B, Lk, Dm).astype(mxu_dtype)
    vp3 = vp.reshape(B, Lk, Dm).astype(mxu_dtype)

    acc = jnp.zeros((B * Lq, Dp), jnp.float32)

    # Static unroll over heads: num_heads is a small compile-time constant here.
    # TODO(synk): at production head counts / d_k, move heads onto a grid axis
    # (or a lax.fori_loop) with a pltpu.VMEM accumulator so per-head temporaries
    # do not stay live across the unroll and weight slabs can stream.
    for h in range(num_heads):
        sl = slice(h * d_k, (h + 1) * d_k)

        # scores: Q.K^T contracting the last axes of both operands (no transpose
        # materialized).  The 1/sqrt(d_k) scale is already folded into W_q/b_q.
        s = jnp.einsum('bqd,bkd->bqk', qp3[:, :, sl], kp3[:, :, sl],
                       preferred_element_type=jnp.float32)
        # TODO(synk): optional attention mask (mask=None path only) would be
        # applied here, before the max subtraction.
        s = s - jnp.max(s, axis=-1, keepdims=True)
        e = jnp.exp(s)
        p = e / jnp.sum(e, axis=-1, keepdims=True)          # exact softmax (f32)

        # probs @ V for this head.
        ctx = jnp.einsum('bqk,bkd->bqd', p.astype(mxu_dtype), vp3[:, :, sl],
                         preferred_element_type=jnp.float32)   # [B, Lq, d_k] f32

        # Accumulated output projection:
        #   sum_h ctx_h @ W_o[h*d_k:(h+1)*d_k, :] == W_o(combine_heads(...)),
        # so no head concat is ever materialized.
        acc = acc + jnp.dot(ctx.reshape(B * Lq, d_k).astype(mxu_dtype),
                            wo_ref[sl, :], preferred_element_type=jnp.float32)

    # TODO(synk): for long Lk, flash-tile the scores over an 'arbitrary' Lk grid
    # axis (online softmax) and re-derive tile sizes for v7x's 64 MiB VMEM;
    # unnecessary at these sizes.
    o_ref[...] = (acc + bo_ref[...]).astype(o_ref.dtype)    # lane-dense store


def multi_head_attention(Q, K, V, params, *, num_heads, mxu_dtype=jnp.bfloat16):
    """Q: [B, Lq, d_model]; K, V: [B, Lk, d_model_text] (or None => self-attn).

    Returns [B, Lq, d_model] in Q.dtype, matching the PyTorch forward (mask=None).
    """
    if K is None:
        K = Q
    if V is None:
        V = Q
    B, Lq, Dq = Q.shape
    _, Lk, Dt = K.shape
    Dm = params["wq"].shape[1]
    assert Dm % num_heads == 0
    d_k = Dm // num_heads
    scale = 1.0 / math.sqrt(d_k)

    # Fold the 1/sqrt(d_k) score scale into W_q / b_q (exact, free host-side).
    wq = params["wq"] * scale
    bq = params["bq"] * scale
    wk, bk = params["wk"], params["bk"]
    wv, bv = params["wv"], params["bv"]
    wo, bo = params["wo"], params["bo"]

    # Lane-dense output: zero-pad the output-projection columns / bias / output
    # slab to a multiple of 128 lanes; the true d_model columns are sliced back
    # off below (cheap XLA slice).
    Dp = ((Dm + 127) // 128) * 128
    if Dp != Dm:
        wo = jnp.pad(wo, ((0, 0), (0, Dp - Dm)))
        bo = jnp.pad(bo, ((0, 0), (0, Dp - Dm)))

    # Low-precision MXU operands (activations + weights, cast host-side);
    # biases stay f32 and are added to the f32 accumulators inside the kernel.
    q2 = Q.reshape(B * Lq, Dq).astype(mxu_dtype)
    k2 = K.reshape(B * Lk, Dt).astype(mxu_dtype)
    v2 = V.reshape(B * Lk, Dt).astype(mxu_dtype)
    wq = wq.astype(mxu_dtype)
    wk = wk.astype(mxu_dtype)
    wv = wv.astype(mxu_dtype)
    wo = wo.astype(mxu_dtype)
    bq = bq.astype(jnp.float32)
    bk = bk.astype(jnp.float32)
    bv = bv.astype(jnp.float32)
    bo = bo.astype(jnp.float32)

    kernel = functools.partial(_mha_kernel, num_heads, B, Lq, Lk)

    # Advisory cost estimate so XLA schedules around the custom call.
    flops = 2 * (B * Lq * Dq * Dm            # Q projection
                 + 2 * B * Lk * Dt * Dm      # K, V projections
                 + 2 * B * Lq * Lk * Dm      # scores + probs@V (all heads)
                 + B * Lq * Dm * Dp)         # output projection
    itemsize = jnp.dtype(mxu_dtype).itemsize
    bytes_accessed = (itemsize * (B * Lq * Dq + 2 * B * Lk * Dt
                                  + Dq * Dm + 2 * Dt * Dm + Dm * Dp)
                      + 4 * (3 * Dm + Dp)               # f32 biases
                      + 4 * B * Lq * Dp)                # f32 output
    cost = pl.CostEstimate(flops=int(flops),
                           transcendentals=int(B * num_heads * Lq * Lk),
                           bytes_accessed=int(bytes_accessed))

    # Single grid step: B is folded into the matmul rows, so single-TC chips
    # pay no per-step pipeline overhead and every input is fetched exactly once
    # (constant-index weight specs therefore need no double buffers).  All
    # blocks equal the full array extents, so the (8, 128) tiling rule does not
    # apply.
    # TODO(synk): at production sizes re-introduce grid=(B, ...) marked
    # "parallel" (+ a flash-tiled 'arbitrary' Lk axis), single-buffer the weight
    # specs (pipeline_mode=pl.Buffered(1)), and re-derive tile sizes for v7x's
    # 64 MiB VMEM.
    grid_spec = pltpu.PrefetchScalarGridSpec(
        num_scalar_prefetch=0,
        grid=(1,),
        in_specs=[
            pl.BlockSpec((B * Lq, Dq), lambda i: (0, 0)),   # Q rows
            pl.BlockSpec((B * Lk, Dt), lambda i: (0, 0)),   # K rows
            pl.BlockSpec((B * Lk, Dt), lambda i: (0, 0)),   # V rows
            pl.BlockSpec((Dq, Dm), lambda i: (0, 0)),       # W_q (pre-scaled)
            pl.BlockSpec((1, Dm), lambda i: (0, 0)),        # b_q (pre-scaled)
            pl.BlockSpec((Dt, Dm), lambda i: (0, 0)),       # W_k
            pl.BlockSpec((1, Dm), lambda i: (0, 0)),        # b_k
            pl.BlockSpec((Dt, Dm), lambda i: (0, 0)),       # W_v
            pl.BlockSpec((1, Dm), lambda i: (0, 0)),        # b_v
            pl.BlockSpec((Dm, Dp), lambda i: (0, 0)),       # W_o (lane-padded)
            pl.BlockSpec((1, Dp), lambda i: (0, 0)),        # b_o (lane-padded)
        ],
        out_specs=pl.BlockSpec((B * Lq, Dp), lambda i: (0, 0)),
    )

    out2 = pl.pallas_call(
        kernel,
        out_shape=jax.ShapeDtypeStruct((B * Lq, Dp), jnp.float32),
        grid_spec=grid_spec,
        compiler_params=pltpu.CompilerParams(
            dimension_semantics=("arbitrary",),
            vmem_limit_bytes=32 * 1024 * 1024),
        cost_estimate=cost,
    )(q2, k2, v2, wq, bq, wk, bk, wv, bv, wo, bo)

    # Un-flatten batch and drop the lane padding (wrapper-side XLA ops).
    return out2.reshape(B, Lq, Dp)[:, :, :Dm].astype(Q.dtype)


def _reference(Q, K, V, params, *, num_heads):
    """Pure-JAX f32 reference mirroring the PyTorch forward (mask=None)."""
    B, Lq, Dm = Q.shape
    _, Lk, Dt = K.shape
    d_k = Dm // num_heads

    def lin(x, w, b):
        return x @ w + b

    q = lin(Q, params["wq"], params["bq"]).reshape(B, Lq, num_heads, d_k).transpose(0, 2, 1, 3)
    k = lin(K, params["wk"], params["bk"]).reshape(B, Lk, num_heads, d_k).transpose(0, 2, 1, 3)
    v = lin(V, params["wv"], params["bv"]).reshape(B, Lk, num_heads, d_k).transpose(0, 2, 1, 3)
    scores = jnp.einsum("bhqd,bhkd->bhqk", q, k) / math.sqrt(d_k)
    probs = jax.nn.softmax(scores, axis=-1)
    attn = jnp.einsum("bhqk,bhkd->bhqd", probs, v)
    attn = attn.transpose(0, 2, 1, 3).reshape(B, Lq, Dm)
    return lin(attn, params["wo"], params["bo"])


def _init_params(key, d_model, d_model_text):
    keys = jax.random.split(key, 8)
    s_in = 1.0 / math.sqrt(d_model)
    s_txt = 1.0 / math.sqrt(d_model_text)
    return {
        "wq": jax.random.normal(keys[0], (d_model, d_model), jnp.float32) * s_in,
        "bq": jax.random.normal(keys[1], (1, d_model), jnp.float32) * s_in,
        "wk": jax.random.normal(keys[2], (d_model_text, d_model), jnp.float32) * s_txt,
        "bk": jax.random.normal(keys[3], (1, d_model), jnp.float32) * s_txt,
        "wv": jax.random.normal(keys[4], (d_model_text, d_model), jnp.float32) * s_txt,
        "bv": jax.random.normal(keys[5], (1, d_model), jnp.float32) * s_txt,
        "wo": jax.random.normal(keys[6], (d_model, d_model), jnp.float32) * s_in,
        "bo": jax.random.normal(keys[7], (1, d_model), jnp.float32) * s_in,
    }


if __name__ == "__main__":
    # Cross-attention with d_model=32 (4 heads of d_k=8) over d_model_text=64.
    B, Lq, Lk = 2, 8, 16
    d_model, num_heads, d_model_text = 32, 4, 64

    root = jax.random.PRNGKey(0)
    kq, kk, kv, kp = jax.random.split(root, 4)
    Q = jax.random.normal(kq, (B, Lq, d_model), jnp.float32)
    K = jax.random.normal(kk, (B, Lk, d_model_text), jnp.float32)
    V = jax.random.normal(kv, (B, Lk, d_model_text), jnp.float32)
    params = _init_params(kp, d_model, d_model_text)

    ref = _reference(Q, K, V, params, num_heads=num_heads)

    # 1) Exact-parity configuration (f32 MXU operands): verifies the kernel's
    #    semantics against the PyTorch-mirroring reference to tight tolerance.
    out_exact = multi_head_attention(Q, K, V, params, num_heads=num_heads,
                                     mxu_dtype=jnp.float32)
    out_exact = jax.block_until_ready(out_exact)
    assert out_exact.shape == (B, Lq, d_model)
    assert jnp.allclose(out_exact, ref, atol=1e-4, rtol=1e-4), "f32 mismatch vs reference"

    # 2) Performance configuration (default): bf16 MXU operands with f32
    #    accumulation / softmax, per the perf review.  bf16 operand quantization
    #    (~3 decimal digits) on O(1) activations bounds agreement to ~1e-2, so
    #    the tolerance is relaxed accordingly.
    out = multi_head_attention(Q, K, V, params, num_heads=num_heads)
    out = jax.block_until_ready(out)
    assert out.shape == (B, Lq, d_model)
    assert jnp.allclose(out, ref, atol=1e-1, rtol=1e-1), "bf16 mismatch vs reference"

    print("KERNEL_OK")
</pallas_src>

<mosaic_0001>
module attributes {stable_mosaic.version = 11 : i64} {
  func.func @_mha_kernel(%arg0: i32, %arg1: memref<16x32xf32, #tpu.memory_space<vmem>>, %arg2: memref<32x64xf32, #tpu.memory_space<vmem>>, %arg3: memref<32x64xf32, #tpu.memory_space<vmem>>, %arg4: memref<32x32xf32, #tpu.memory_space<vmem>>, %arg5: memref<1x32xf32, #tpu.memory_space<vmem>>, %arg6: memref<64x32xf32, #tpu.memory_space<vmem>>, %arg7: memref<1x32xf32, #tpu.memory_space<vmem>>, %arg8: memref<64x32xf32, #tpu.memory_space<vmem>>, %arg9: memref<1x32xf32, #tpu.memory_space<vmem>>, %arg10: memref<32x128xf32, #tpu.memory_space<vmem>>, %arg11: memref<1x128xf32, #tpu.memory_space<vmem>>, %arg12: memref<16x128xf32, #tpu.memory_space<vmem>>) attributes {dimension_semantics = [#tpu.dimension_semantics<arbitrary>], iteration_bounds = array<i64: 1>, scalar_prefetch = 0 : i64, scratch_operands = 0 : i64, tpu.core_type = #tpu.core_type<tc>, window_params = [{pipeline_mode = #tpu.pipeline_mode<synchronous>, transform_indices = @transform_0, window_bounds = array<i64: 16, 32>}, {pipeline_mode = #tpu.pipeline_mode<synchronous>, transform_indices = @transform_1, window_bounds = array<i64: 32, 64>}, {pipeline_mode = #tpu.pipeline_mode<synchronous>, transform_indices = @transform_2, window_bounds = array<i64: 32, 64>}, {pipeline_mode = #tpu.pipeline_mode<synchronous>, transform_indices = @transform_3, window_bounds = array<i64: 32, 32>}, {pipeline_mode = #tpu.pipeline_mode<synchronous>, transform_indices = @transform_4, window_bounds = array<i64: 1, 32>}, {pipeline_mode = #tpu.pipeline_mode<synchronous>, transform_indices = @transform_5, window_bounds = array<i64: 64, 32>}, {pipeline_mode = #tpu.pipeline_mode<synchronous>, transform_indices = @transform_6, window_bounds = array<i64: 1, 32>}, {pipeline_mode = #tpu.pipeline_mode<synchronous>, transform_indices = @transform_7, window_bounds = array<i64: 64, 32>}, {pipeline_mode = #tpu.pipeline_mode<synchronous>, transform_indices = @transform_8, window_bounds = array<i64: 1, 32>}, {pipeline_mode = #tpu.pipeline_mode<synchronous>, transform_indices = @transform_9, window_bounds = array<i64: 32, 128>}, {pipeline_mode = #tpu.pipeline_mode<synchronous>, transform_indices = @transform_10, window_bounds = array<i64: 1, 128>}, {pipeline_mode = #tpu.pipeline_mode<synchronous>, transform_indices = @transform_11, window_bounds = array<i64: 16, 128>}]} {
    %c0 = arith.constant 0 : index
    %c0_0 = arith.constant 0 : index
    %0 = vector.load %arg1[%c0, %c0_0] : memref<16x32xf32, #tpu.memory_space<vmem>>, vector<16x32xf32>
    %c0_1 = arith.constant 0 : index
    %c0_2 = arith.constant 0 : index
    %1 = vector.load %arg4[%c0_1, %c0_2] : memref<32x32xf32, #tpu.memory_space<vmem>>, vector<32x32xf32>
    %cst = arith.constant dense<0.000000e+00> : vector<16x32xf32>
    %2 = tpu.matmul %0, %1, %cst {dimension_numbers = #tpu.dot_dimension_numbers<[1], [0], [0], [1], [0, 0, 1, 1], [], []>} : vector<16x32xf32>, vector<32x32xf32>, vector<16x32xf32> -> vector<16x32xf32>
    %c0_3 = arith.constant 0 : index
    %c0_4 = arith.constant 0 : index
    %3 = vector.load %arg5[%c0_3, %c0_4] : memref<1x32xf32, #tpu.memory_space<vmem>>, vector<1x32xf32>
    %4 = vector.broadcast %3 : vector<1x32xf32> to vector<16x32xf32>
    %5 = arith.addf %2, %4 : vector<16x32xf32>
    %c0_5 = arith.constant 0 : index
    %c0_6 = arith.constant 0 : index
    %6 = vector.load %arg2[%c0_5, %c0_6] : memref<32x64xf32, #tpu.memory_space<vmem>>, vector<32x64xf32>
    %c0_7 = arith.constant 0 : index
    %c0_8 = arith.constant 0 : index
    %7 = vector.load %arg6[%c0_7, %c0_8] : memref<64x32xf32, #tpu.memory_space<vmem>>, vector<64x32xf32>
    %cst_9 = arith.constant dense<0.000000e+00> : vector<32x32xf32>
    %8 = tpu.matmul %6, %7, %cst_9 {dimension_numbers = #tpu.dot_dimension_numbers<[1], [0], [0], [1], [0, 0, 1, 1], [], []>} : vector<32x64xf32>, vector<64x32xf32>, vector<32x32xf32> -> vector<32x32xf32>
    %c0_10 = arith.constant 0 : index
    %c0_11 = arith.constant 0 : index
    %9 = vector.load %arg7[%c0_10, %c0_11] : memref<1x32xf32, #tpu.memory_space<vmem>>, vector<1x32xf32>
    %10 = vector.broadcast %9 : vector<1x32xf32> to vector<32x32xf32>
    %11 = arith.addf %8, %10 : vector<32x32xf32>
    %c0_12 = arith.constant 0 : index
    %c0_13 = arith.constant 0 : index
    %12 = vector.load %arg3[%c0_12, %c0_13] : memref<32x64xf32, #tpu.memory_space<vmem>>, vector<32x64xf32>
    %c0_14 = arith.constant 0 : index
    %c0_15 = arith.constant 0 : index
    %13 = vector.load %arg8[%c0_14, %c0_15] : memref<64x32xf32, #tpu.memory_space<vmem>>, vector<64x32xf32>
    %cst_16 = arith.constant dense<0.000000e+00> : vector<32x32xf32>
    %14 = tpu.matmul %12, %13, %cst_16 {dimension_numbers = #tpu.dot_dimension_numbers<[1], [0], [0], [1], [0, 0, 1, 1], [], []>} : vector<32x64xf32>, vector<64x32xf32>, vector<32x32xf32> -> vector<32x32xf32>
    %c0_17 = arith.constant 0 : index
    %c0_18 = arith.constant 0 : index
    %15 = vector.load %arg9[%c0_17, %c0_18] : memref<1x32xf32, #tpu.memory_space<vmem>>, vector<1x32xf32>
    %16 = vector.broadcast %15 : vector<1x32xf32> to vector<32x32xf32>
    %17 = arith.addf %14, %16 : vector<32x32xf32>
    %18 = vector.shape_cast %5 : vector<16x32xf32> to vector<2x8x32xf32>
    %19 = vector.shape_cast %11 : vector<32x32xf32> to vector<2x16x32xf32>
    %20 = vector.shape_cast %17 : vector<32x32xf32> to vector<2x16x32xf32>
    %cst_19 = arith.constant 0.000000e+00 : f32
    %21 = vector.broadcast %cst_19 : f32 to vector<16x128xf32>
    %22 = vector.extract_strided_slice %18 {offsets = [0, 0, 0], sizes = [2, 8, 8], strides = [1, 1, 1]} : vector<2x8x32xf32> to vector<2x8x8xf32>
    %23 = vector.extract_strided_slice %19 {offsets = [0, 0, 0], sizes = [2, 16, 8], strides = [1, 1, 1]} : vector<2x16x32xf32> to vector<2x16x8xf32>
    "tpu.trace_start"() <{level = 10 : i32, message = "bqd,bkd->bqk"}> : () -> ()
    %cst_20 = arith.constant dense<0.000000e+00> : vector<2x8x16xf32>
    %24 = tpu.matmul %22, %23, %cst_20 {dimension_numbers = #tpu.dot_dimension_numbers<[2], [2], [1], [1], [0, 0, 0, 1, 1, 1], [0], [0]>} : vector<2x8x8xf32>, vector<2x16x8xf32>, vector<2x8x16xf32> -> vector<2x8x16xf32>
    "tpu.trace_stop"() : () -> ()
    %cst_21 = arith.constant dense<0xFF800000> : vector<2x8xf32>
    %25 = vector.multi_reduction <maximumf>, %24, %cst_21 [2] : vector<2x8x16xf32> to vector<2x8xf32>
    %26 = vector.shape_cast %25 : vector<2x8xf32> to vector<2x8x1xf32>
    %27 = vector.broadcast %26 : vector<2x8x1xf32> to vector<2x8x16xf32>
    %28 = arith.subf %24, %27 : vector<2x8x16xf32>
    %29 = math.exp %28 : vector<2x8x16xf32>
    %cst_22 = arith.constant dense<0.000000e+00> : vector<2x8xf32>
    %30 = vector.multi_reduction <add>, %29, %cst_22 [2] : vector<2x8x16xf32> to vector<2x8xf32>
    %31 = vector.shape_cast %30 : vector<2x8xf32> to vector<2x8x1xf32>
    %32 = vector.broadcast %31 : vector<2x8x1xf32> to vector<2x8x16xf32>
    %33 = arith.divf %29, %32 : vector<2x8x16xf32>
    %34 = vector.extract_strided_slice %20 {offsets = [0, 0, 0], sizes = [2, 16, 8], strides = [1, 1, 1]} : vector<2x16x32xf32> to vector<2x16x8xf32>
    "tpu.trace_start"() <{level = 10 : i32, message = "bqk,bkd->bqd"}> : () -> ()
    %cst_23 = arith.constant dense<0.000000e+00> : vector<2x8x8xf32>
    %35 = tpu.matmul %33, %34, %cst_23 {dimension_numbers = #tpu.dot_dimension_numbers<[2], [1], [1], [2], [0, 0, 0, 1, 1, 2], [0], [0]>} : vector<2x8x16xf32>, vector<2x16x8xf32>, vector<2x8x8xf32> -> vector<2x8x8xf32>
    "tpu.trace_stop"() : () -> ()
    %36 = vector.shape_cast %35 : vector<2x8x8xf32> to vector<16x8xf32>
    %c0_24 = arith.constant 0 : index
    %c0_25 = arith.constant 0 : index
    %37 = vector.load %arg10[%c0_24, %c0_25] : memref<32x128xf32, #tpu.memory_space<vmem>>, vector<8x128xf32>
    %cst_26 = arith.constant dense<0.000000e+00> : vector<16x128xf32>
    %38 = tpu.matmul %36, %37, %cst_26 {dimension_numbers = #tpu.dot_dimension_numbers<[1], [0], [0], [1], [0, 0, 1, 1], [], []>} : vector<16x8xf32>, vector<8x128xf32>, vector<16x128xf32> -> vector<16x128xf32>
    %39 = arith.addf %21, %38 : vector<16x128xf32>
    %40 = vector.extract_strided_slice %18 {offsets = [0, 0, 8], sizes = [2, 8, 8], strides = [1, 1, 1]} : vector<2x8x32xf32> to vector<2x8x8xf32>
    %41 = vector.extract_strided_slice %19 {offsets = [0, 0, 8], sizes = [2, 16, 8], strides = [1, 1, 1]} : vector<2x16x32xf32> to vector<2x16x8xf32>
    "tpu.trace_start"() <{level = 10 : i32, message = "bqd,bkd->bqk"}> : () -> ()
    %cst_27 = arith.constant dense<0.000000e+00> : vector<2x8x16xf32>
    %42 = tpu.matmul %40, %41, %cst_27 {dimension_numbers = #tpu.dot_dimension_numbers<[2], [2], [1], [1], [0, 0, 0, 1, 1, 1], [0], [0]>} : vector<2x8x8xf32>, vector<2x16x8xf32>, vector<2x8x16xf32> -> vector<2x8x16xf32>
    "tpu.trace_stop"() : () -> ()
    %cst_28 = arith.constant dense<0xFF800000> : vector<2x8xf32>
    %43 = vector.multi_reduction <maximumf>, %42, %cst_28 [2] : vector<2x8x16xf32> to vector<2x8xf32>
    %44 = vector.shape_cast %43 : vector<2x8xf32> to vector<2x8x1xf32>
    %45 = vector.broadcast %44 : vector<2x8x1xf32> to vector<2x8x16xf32>
    %46 = arith.subf %42, %45 : vector<2x8x16xf32>
    %47 = math.exp %46 : vector<2x8x16xf32>
    %cst_29 = arith.constant dense<0.000000e+00> : vector<2x8xf32>
    %48 = vector.multi_reduction <add>, %47, %cst_29 [2] : vector<2x8x16xf32> to vector<2x8xf32>
    %49 = vector.shape_cast %48 : vector<2x8xf32> to vector<2x8x1xf32>
    %50 = vector.broadcast %49 : vector<2x8x1xf32> to vector<2x8x16xf32>
    %51 = arith.divf %47, %50 : vector<2x8x16xf32>
    %52 = vector.extract_strided_slice %20 {offsets = [0, 0, 8], sizes = [2, 16, 8], strides = [1, 1, 1]} : vector<2x16x32xf32> to vector<2x16x8xf32>
    "tpu.trace_start"() <{level = 10 : i32, message = "bqk,bkd->bqd"}> : () -> ()
    %cst_30 = arith.constant dense<0.000000e+00> : vector<2x8x8xf32>
    %53 = tpu.matmul %51, %52, %cst_30 {dimension_numbers = #tpu.dot_dimension_numbers<[2], [1], [1], [2], [0, 0, 0, 1, 1, 2], [0], [0]>} : vector<2x8x16xf32>, vector<2x16x8xf32>, vector<2x8x8xf32> -> vector<2x8x8xf32>
    "tpu.trace_stop"() : () -> ()
    %54 = vector.shape_cast %53 : vector<2x8x8xf32> to vector<16x8xf32>
    %c8 = arith.constant 8 : index
    %c0_31 = arith.constant 0 : index
    %55 = vector.load %arg10[%c8, %c0_31] : memref<32x128xf32, #tpu.memory_space<vmem>>, vector<8x128xf32>
    %cst_32 = arith.constant dense<0.000000e+00> : vector<16x128xf32>
    %56 = tpu.matmul %54, %55, %cst_32 {dimension_numbers = #tpu.dot_dimension_numbers<[1], [0], [0], [1], [0, 0, 1, 1], [], []>} : vector<16x8xf32>, vector<8x128xf32>, vector<16x128xf32> -> vector<16x128xf32>
    %57 = arith.addf %39, %56 : vector<16x128xf32>
    %58 = vector.extract_strided_slice %18 {offsets = [0, 0, 16], sizes = [2, 8, 8], strides = [1, 1, 1]} : vector<2x8x32xf32> to vector<2x8x8xf32>
    %59 = vector.extract_strided_slice %19 {offsets = [0, 0, 16], sizes = [2, 16, 8], strides = [1, 1, 1]} : vector<2x16x32xf32> to vector<2x16x8xf32>
    "tpu.trace_start"() <{level = 10 : i32, message = "bqd,bkd->bqk"}> : () -> ()
    %cst_33 = arith.constant dense<0.000000e+00> : vector<2x8x16xf32>
    %60 = tpu.matmul %58, %59, %cst_33 {dimension_numbers = #tpu.dot_dimension_numbers<[2], [2], [1], [1], [0, 0, 0, 1, 1, 1], [0], [0]>} : vector<2x8x8xf32>, vector<2x16x8xf32>, vector<2x8x16xf32> -> vector<2x8x16xf32>
    "tpu.trace_stop"() : () -> ()
    %cst_34 = arith.constant dense<0xFF800000> : vector<2x8xf32>
    %61 = vector.multi_reduction <maximumf>, %60, %cst_34 [2] : vector<2x8x16xf32> to vector<2x8xf32>
    %62 = vector.shape_cast %61 : vector<2x8xf32> to vector<2x8x1xf32>
    %63 = vector.broadcast %62 : vector<2x8x1xf32> to vector<2x8x16xf32>
    %64 = arith.subf %60, %63 : vector<2x8x16xf32>
    %65 = math.exp %64 : vector<2x8x16xf32>
    %cst_35 = arith.constant dense<0.000000e+00> : vector<2x8xf32>
    %66 = vector.multi_reduction <add>, %65, %cst_35 [2] : vector<2x8x16xf32> to vector<2x8xf32>
    %67 = vector.shape_cast %66 : vector<2x8xf32> to vector<2x8x1xf32>
    %68 = vector.broadcast %67 : vector<2x8x1xf32> to vector<2x8x16xf32>
    %69 = arith.divf %65, %68 : vector<2x8x16xf32>
    %70 = vector.extract_strided_slice %20 {offsets = [0, 0, 16], sizes = [2, 16, 8], strides = [1, 1, 1]} : vector<2x16x32xf32> to vector<2x16x8xf32>
    "tpu.trace_start"() <{level = 10 : i32, message = "bqk,bkd->bqd"}> : () -> ()
    %cst_36 = arith.constant dense<0.000000e+00> : vector<2x8x8xf32>
    %71 = tpu.matmul %69, %70, %cst_36 {dimension_numbers = #tpu.dot_dimension_numbers<[2], [1], [1], [2], [0, 0, 0, 1, 1, 2], [0], [0]>} : vector<2x8x16xf32>, vector<2x16x8xf32>, vector<2x8x8xf32> -> vector<2x8x8xf32>
    "tpu.trace_stop"() : () -> ()
    %72 = vector.shape_cast %71 : vector<2x8x8xf32> to vector<16x8xf32>
    %c16 = arith.constant 16 : index
    %c0_37 = arith.constant 0 : index
    %73 = vector.load %arg10[%c16, %c0_37] : memref<32x128xf32, #tpu.memory_space<vmem>>, vector<8x128xf32>
    %cst_38 = arith.constant dense<0.000000e+00> : vector<16x128xf32>
    %74 = tpu.matmul %72, %73, %cst_38 {dimension_numbers = #tpu.dot_dimension_numbers<[1], [0], [0], [1], [0, 0, 1, 1], [], []>} : vector<16x8xf32>, vector<8x128xf32>, vector<16x128xf32> -> vector<16x128xf32>
    %75 = arith.addf %57, %74 : vector<16x128xf32>
    %76 = vector.extract_strided_slice %18 {offsets = [0, 0, 24], sizes = [2, 8, 8], strides = [1, 1, 1]} : vector<2x8x32xf32> to vector<2x8x8xf32>
    %77 = vector.extract_strided_slice %19 {offsets = [0, 0, 24], sizes = [2, 16, 8], strides = [1, 1, 1]} : vector<2x16x32xf32> to vector<2x16x8xf32>
    "tpu.trace_start"() <{level = 10 : i32, message = "bqd,bkd->bqk"}> : () -> ()
    %cst_39 = arith.constant dense<0.000000e+00> : vector<2x8x16xf32>
    %78 = tpu.matmul %76, %77, %cst_39 {dimension_numbers = #tpu.dot_dimension_numbers<[2], [2], [1], [1], [0, 0, 0, 1, 1, 1], [0], [0]>} : vector<2x8x8xf32>, vector<2x16x8xf32>, vector<2x8x16xf32> -> vector<2x8x16xf32>
    "tpu.trace_stop"() : () -> ()
    %cst_40 = arith.constant dense<0xFF800000> : vector<2x8xf32>
    %79 = vector.multi_reduction <maximumf>, %78, %cst_40 [2] : vector<2x8x16xf32> to vector<2x8xf32>
    %80 = vector.shape_cast %79 : vector<2x8xf32> to vector<2x8x1xf32>
    %81 = vector.broadcast %80 : vector<2x8x1xf32> to vector<2x8x16xf32>
    %82 = arith.subf %78, %81 : vector<2x8x16xf32>
    %83 = math.exp %82 : vector<2x8x16xf32>
    %cst_41 = arith.constant dense<0.000000e+00> : vector<2x8xf32>
    %84 = vector.multi_reduction <add>, %83, %cst_41 [2] : vector<2x8x16xf32> to vector<2x8xf32>
    %85 = vector.shape_cast %84 : vector<2x8xf32> to vector<2x8x1xf32>
    %86 = vector.broadcast %85 : vector<2x8x1xf32> to vector<2x8x16xf32>
    %87 = arith.divf %83, %86 : vector<2x8x16xf32>
    %88 = vector.extract_strided_slice %20 {offsets = [0, 0, 24], sizes = [2, 16, 8], strides = [1, 1, 1]} : vector<2x16x32xf32> to vector<2x16x8xf32>
    "tpu.trace_start"() <{level = 10 : i32, message = "bqk,bkd->bqd"}> : () -> ()
    %cst_42 = arith.constant dense<0.000000e+00> : vector<2x8x8xf32>
    %89 = tpu.matmul %87, %88, %cst_42 {dimension_numbers = #tpu.dot_dimension_numbers<[2], [1], [1], [2], [0, 0, 0, 1, 1, 2], [0], [0]>} : vector<2x8x16xf32>, vector<2x16x8xf32>, vector<2x8x8xf32> -> vector<2x8x8xf32>
    "tpu.trace_stop"() : () -> ()
    %90 = vector.shape_cast %89 : vector<2x8x8xf32> to vector<16x8xf32>
    %c24 = arith.constant 24 : index
    %c0_43 = arith.constant 0 : index
    %91 = vector.load %arg10[%c24, %c0_43] : memref<32x128xf32, #tpu.memory_space<vmem>>, vector<8x128xf32>
    %cst_44 = arith.constant dense<0.000000e+00> : vector<16x128xf32>
    %92 = tpu.matmul %90, %91, %cst_44 {dimension_numbers = #tpu.dot_dimension_numbers<[1], [0], [0], [1], [0, 0, 1, 1], [], []>} : vector<16x8xf32>, vector<8x128xf32>, vector<16x128xf32> -> vector<16x128xf32>
    %93 = arith.addf %75, %92 : vector<16x128xf32>
    %c0_45 = arith.constant 0 : index
    %c0_46 = arith.constant 0 : index
    %94 = vector.load %arg11[%c0_45, %c0_46] : memref<1x128xf32, #tpu.memory_space<vmem>>, vector<1x128xf32>
    %95 = vector.broadcast %94 : vector<1x128xf32> to vector<16x128xf32>
    %96 = arith.addf %93, %95 : vector<16x128xf32>
    %c0_47 = arith.constant 0 : index
    %c0_48 = arith.constant 0 : index
    %97 = vector.load %arg12[%c0_47, %c0_48] : memref<16x128xf32, #tpu.memory_space<vmem>>, vector<16x128xf32>
    tpu.vector_store %arg12[%c0_47, %c0_48], %96 {strides = array<i32>} : memref<16x128xf32, #tpu.memory_space<vmem>>, vector<16x128xf32>,
    return
  }
  func.func @transform_0(%arg0: i32) -> (i32, i32) {
    %c0_i32 = arith.constant 0 : i32
    %c0_i32_0 = arith.constant 0 : i32
    %c0_i32_1 = arith.constant 0 : i32
    return %c0_i32, %c0_i32_0 : i32, i32
  }
  func.func @transform_1(%arg0: i32) -> (i32, i32) {
    %c0_i32 = arith.constant 0 : i32
    %c0_i32_0 = arith.constant 0 : i32
    %c0_i32_1 = arith.constant 0 : i32
    return %c0_i32, %c0_i32_0 : i32, i32
  }
  func.func @transform_2(%arg0: i32) -> (i32, i32) {
    %c0_i32 = arith.constant 0 : i32
    %c0_i32_0 = arith.constant 0 : i32
    %c0_i32_1 = arith.constant 0 : i32
    return %c0_i32, %c0_i32_0 : i32, i32
  }
  func.func @transform_3(%arg0: i32) -> (i32, i32) {
    %c0_i32 = arith.constant 0 : i32
    %c0_i32_0 = arith.constant 0 : i32
    %c0_i32_1 = arith.constant 0 : i32
    return %c0_i32, %c0_i32_0 : i32, i32
  }
  func.func @transform_4(%arg0: i32) -> (i32, i32) {
    %c0_i32 = arith.constant 0 : i32
    %c0_i32_0 = arith.constant 0 : i32
    %c0_i32_1 = arith.constant 0 : i32
    return %c0_i32, %c0_i32_0 : i32, i32
  }
  func.func @transform_5(%arg0: i32) -> (i32, i32) {
    %c0_i32 = arith.constant 0 : i32
    %c0_i32_0 = arith.constant 0 : i32
    %c0_i32_1 = arith.constant 0 : i32
    return %c0_i32, %c0_i32_0 : i32, i32
  }
  func.func @transform_6(%arg0: i32) -> (i32, i32) {
    %c0_i32 = arith.constant 0 : i32
    %c0_i32_0 = arith.constant 0 : i32
    %c0_i32_1 = arith.constant 0 : i32
    return %c0_i32, %c0_i32_0 : i32, i32
  }
  func.func @transform_7(%arg0: i32) -> (i32, i32) {
    %c0_i32 = arith.constant 0 : i32
    %c0_i32_0 = arith.constant 0 : i32
    %c0_i32_1 = arith.constant 0 : i32
    return %c0_i32, %c0_i32_0 : i32, i32
  }
  func.func @transform_8(%arg0: i32) -> (i32, i32) {
    %c0_i32 = arith.constant 0 : i32
    %c0_i32_0 = arith.constant 0 : i32
    %c0_i32_1 = arith.constant 0 : i32
    return %c0_i32, %c0_i32_0 : i32, i32
  }
  func.func @transform_9(%arg0: i32) -> (i32, i32) {
    %c0_i32 = arith.constant 0 : i32
    %c0_i32_0 = arith.constant 0 : i32
    %c0_i32_1 = arith.constant 0 : i32
    return %c0_i32, %c0_i32_0 : i32, i32
  }
  func.func @transform_10(%arg0: i32) -> (i32, i32) {
    %c0_i32 = arith.constant 0 : i32
    %c0_i32_0 = arith.constant 0 : i32
    %c0_i32_1 = arith.constant 0 : i32
    return %c0_i32, %c0_i32_0 : i32, i32
  }
  func.func @transform_11(%arg0: i32) -> (i32, i32) {
    %c0_i32 = arith.constant 0 : i32
    %c0_i32_0 = arith.constant 0 : i32
    %c0_i32_1 = arith.constant 0 : i32
    return %c0_i32, %c0_i32_0 : i32, i32
  }
}

</mosaic_0001>

<llo_original>
// kernel: tpu_custom_call.1
$region0: #{tpu_custom_call.1}
  #allocation0 [shape = 'u32[]', space=smem, size = 0x4, offset = 0x4, fixed_abs, tag = 'smem constant byte address 0x4 - core index']
  #allocation1 [shape = 'u32[144,128]{1,0:T(1,128)}', space=vmem, size = 0x12000, scoped, tag = 'internal scratch']
  %s0 = inlined_call_operand.vmem [shape: f32[16,32], index: 0, kind: input, shape index: {}]
  %s1 = inlined_call_operand.vmem [shape: f32[32,64], index: 1, kind: input, shape index: {}]
  %s2 = inlined_call_operand.vmem [shape: f32[32,64], index: 2, kind: input, shape index: {}]
  %s3 = inlined_call_operand.vmem [shape: f32[32,32], index: 3, kind: input, shape index: {}]
  %s4 = inlined_call_operand.vmem [shape: f32[1,32], index: 4, kind: input, shape index: {}]
  %s5 = inlined_call_operand.vmem [shape: f32[64,32], index: 5, kind: input, shape index: {}]
  %s6 = inlined_call_operand.vmem [shape: f32[1,32], index: 6, kind: input, shape index: {}]
  %s7 = inlined_call_operand.vmem [shape: f32[64,32], index: 7, kind: input, shape index: {}]
  %s8 = inlined_call_operand.vmem [shape: f32[1,32], index: 8, kind: input, shape index: {}]
  %s9 = inlined_call_operand.vmem [shape: f32[32,128], index: 9, kind: input, shape index: {}]
  %s10 = inlined_call_operand.vmem [shape: f32[1,128], index: 10, kind: input, shape index: {}]
  %s11 = inlined_call_operand.hbm [shape: f32[16,128], index: 11, kind: output, shape index: {}]
  %s12 = sld [smem:[#allocation0]]
  $region54: #{tpu_custom_call.1} parent=0
    _
  %s14 = ssub.s32 1, %s12
  %s15 = scalar_select 0, %s14, %s12
  $region1: #{tpu_custom_call.1} parent=0
    #allocation2 [shape = 'u8[8192]{0}', space=vmem, size = 0x2000, scoped, tag = 'output window, operand 0, single buffered']
    #allocation3 [shape = 's32[1]{0}', space=sflag, size = 0x4, scoped, tag = 'scoped memory for tpu_custom_call.1']
    %16 = vsyncpa [#allocation3], 0
    // Predicated region
    $region2: #{tpu_custom_call.1} parent=1 // pred_check
      _
    $region3: #{tpu_custom_call.1} parent=1 // pred_check_branch
      %18 = sbr.rel (0) target = $region5
    $region4: #{tpu_custom_call.1} parent=1 // pred_region
      _
    $region5: #{tpu_custom_call.1} parent=1 // pred_fallthru
      _
    // Predicated region
    $region6: #{tpu_custom_call.1} parent=1 // pred_check
      _
    $region7: #{tpu_custom_call.1} parent=1 // pred_check_branch
      %20 = sbr.rel (0) target = $region9
    $region8: #{tpu_custom_call.1} parent=1 // pred_region
      _
    $region9: #{tpu_custom_call.1} parent=1 // pred_fallthru
      _
    // Predicated region
    $region10: #{tpu_custom_call.1} parent=1 // pred_check
      _
    $region11: #{tpu_custom_call.1} parent=1 // pred_check_branch
      %22 = sbr.rel (0) target = $region13
    $region12: #{tpu_custom_call.1} parent=1 // pred_region
      _
    $region13: #{tpu_custom_call.1} parent=1 // pred_fallthru
      _
    // Predicated region
    $region14: #{tpu_custom_call.1} parent=1 // pred_check
      _
    $region15: #{tpu_custom_call.1} parent=1 // pred_check_branch
      %24 = sbr.rel (0) target = $region17
    $region16: #{tpu_custom_call.1} parent=1 // pred_region
      _
    $region17: #{tpu_custom_call.1} parent=1 // pred_fallthru
      _
    // Predicated region
    $region18: #{tpu_custom_call.1} parent=1 // pred_check
      _
    $region19: #{tpu_custom_call.1} parent=1 // pred_check_branch
      %26 = sbr.rel (0) target = $region21
    $region20: #{tpu_custom_call.1} parent=1 // pred_region
      _
    $region21: #{tpu_custom_call.1} parent=1 // pred_fallthru
      _
    // Predicated region
    $region22: #{tpu_custom_call.1} parent=1 // pred_check
      _
    $region23: #{tpu_custom_call.1} parent=1 // pred_check_branch
      %28 = sbr.rel (0) target = $region25
    $region24: #{tpu_custom_call.1} parent=1 // pred_region
      _
    $region25: #{tpu_custom_call.1} parent=1 // pred_fallthru
      _
    // Predicated region
    $region26: #{tpu_custom_call.1} parent=1 // pred_check
      _
    $region27: #{tpu_custom_call.1} parent=1 // pred_check_branch
      %30 = sbr.rel (0) target = $region29
    $region28: #{tpu_custom_call.1} parent=1 // pred_region
      _
    $region29: #{tpu_custom_call.1} parent=1 // pred_fallthru
      _
    // Predicated region
    $region30: #{tpu_custom_call.1} parent=1 // pred_check
      _
    $region31: #{tpu_custom_call.1} parent=1 // pred_check_branch
      %32 = sbr.rel (0) target = $region33
    $region32: #{tpu_custom_call.1} parent=1 // pred_region
      _
    $region33: #{tpu_custom_call.1} parent=1 // pred_fallthru
      _
    // Predicated region
    $region34: #{tpu_custom_call.1} parent=1 // pred_check
      _
    $region35: #{tpu_custom_call.1} parent=1 // pred_check_branch
      %34 = sbr.rel (0) target = $region37
    $region36: #{tpu_custom_call.1} parent=1 // pred_region
      _
    $region37: #{tpu_custom_call.1} parent=1 // pred_fallthru
      _
    // Predicated region
    $region38: #{tpu_custom_call.1} parent=1 // pred_check
      _
    $region39: #{tpu_custom_call.1} parent=1 // pred_check_branch
      %36 = sbr.rel (0) target = $region41
    $region40: #{tpu_custom_call.1} parent=1 // pred_region
      _
    $region41: #{tpu_custom_call.1} parent=1 // pred_fallthru
      _
    // Predicated region
    $region42: #{tpu_custom_call.1} parent=1 // pred_check
      _
    $region43: #{tpu_custom_call.1} parent=1 // pred_check_branch
      %38 = sbr.rel (0) target = $region45
    $region44: #{tpu_custom_call.1} parent=1 // pred_region
      _
    $region45: #{tpu_custom_call.1} parent=1 // pred_fallthru
      _
    %v39 = vld [vmem:[%s0] sm:$0xff]
    %v40 = vld [vmem:[%s0 + $0x8] sm:$0xff]
    %v41 = vld [vmem:[%s3] sm:$0xff]
    %v42 = vld [vmem:[%s3 + $0x8] sm:$0xff]
    %v43 = vld [vmem:[%s3 + $0x10] sm:$0xff]
    %v44 = vld [vmem:[%s3 + $0x18] sm:$0xff]
    %v45 = vld [vmem:[%s4] sm:$0x1]
    %v47 = vlaneseq
    %v48 = vshrl.u32 %v47, 7
    %v49 = vsub.s32 0, %v48
    %v50 = vrot.slane %v45, %v49
    %vm52 = vcmask 261120
    %v54 = vsel %vm52, %v39, 0
    %v57 = vsel %vm52, %v40, 0
    %59 = vmatprep.subr.mxu0 0.0
    %60 = vmatpush1.msra.mxu0 %v41
    %61 = vmatprep.subr.mxu0 0.0
    %62 = vmatpush1.msra.mxu0 %v42
    %63 = vmatprep.subr.mxu0 0.0
    %64 = vmatpush1.msra.mxu0 %v43
    %65 = vmatprep.subr.mxu0 0.0
    %66 = vmatpush1.msra.mxu0 %v44
    %67 = vmatprep.subr.mxu0 0.0
    %68 = vmatpush1.msra.mxu0 0.0
    %69 = vmatprep.subr.mxu0 0.0
    %70 = vmatpush1.msra.mxu0 0.0
    %71 = vmatprep.subr.mxu0 0.0
    %72 = vmatpush1.msra.mxu0 0.0
    %73 = vmatprep.subr.mxu0 0.0
    %74 = vmatpush1.msra.mxu0 0.0
    %75 = vmatprep.subr.mxu0 0.0
    %76 = vmatpush1.msra.mxu0 0.0
    %77 = vmatprep.subr.mxu0 0.0
    %78 = vmatpush1.msra.mxu0 0.0
    %79 = vmatprep.subr.mxu0 0.0
    %80 = vmatpush1.msra.mxu0 0.0
    %81 = vmatprep.subr.mxu0 0.0
    %82 = vmatpush1.msra.mxu0 0.0
    %83 = vmatprep.subr.mxu0 0.0
    %84 = vmatpush1.msra.mxu0 0.0
    %85 = vmatprep.subr.mxu0 0.0
    %86 = vmatpush1.msra.mxu0 0.0
    %87 = vmatprep.subr.mxu0 0.0
    %88 = vmatpush1.msra.mxu0 0.0
    %89 = vmatprep.subr.mxu0 0.0
    %90 = vmatpush1.msra.mxu0 0.0
    %91 = vmatprep.subr.mxu0 0.0
    %92 = vmatpush1.msra.mxu0 0.0
    %93 = vmatprep.subr.mxu0 0.0
    %94 = vmatpush1.msra.mxu0 0.0
    %95 = vmatprep.subr.mxu0 0.0
    %96 = vmatpush1.msra.mxu0 0.0
    %97 = vmatprep.subr.mxu0 0.0
    %98 = vmatpush1.msra.mxu0 0.0
    %99 = vmatprep.subr.mxu0 0.0
    %100 = vmatpush1.msra.mxu0 0.0
    %101 = vmatprep.subr.mxu0 0.0
    %102 = vmatpush1.msra.mxu0 0.0
    %103 = vmatprep.subr.mxu0 0.0
    %104 = vmatpush1.msra.mxu0 0.0
    %105 = vmatprep.subr.mxu0 0.0
    %106 = vmatpush1.msra.mxu0 0.0
    %107 = vmatprep.subr.mxu0 0.0
    %108 = vmatpush1.msra.mxu0 0.0
    %109 = vmatprep.subr.mxu0 0.0
    %110 = vmatpush1.msra.mxu0 0.0
    %111 = vmatprep.subr.mxu0 0.0
    %112 = vmatpush1.msra.mxu0 0.0
    %113 = vmatprep.subr.mxu0 0.0
    %114 = vmatpush1.msra.mxu0 0.0
    %115 = vmatprep.subr.mxu0 0.0
    %116 = vmatpush1.msra.mxu0 0.0
    %117 = vmatprep.subr.mxu0 0.0
    %118 = vmatpush1.msra.mxu0 0.0
    %119 = vmatprep.subr.mxu0 0.0
    %120 = vmatpush1.msra.mxu0 0.0
    %121 = vmatprep.subr.mxu0 0.0
    %122 = vmatpush1.msra.mxu0 0.0
    %123 = vmatprep.mubr.f32.mxu0 0.0
    %124 = vmatmul.mubr.f32.gmra.mrb[0].mxu0 %v54
    %v125 = vpop.f32.mrb[0].mxu0
    %v126 = vadd.f32 %v50, %v125
    %v127 = vpop.f32.mrb[0].mxu0
    %128 = vmatprep.mubr.f32.mxu0 0.0
    %129 = vmatmul.mubr.f32.gmra.mrb[0].mxu0 %v57
    %v130 = vpop.f32.mrb[0].mxu0
    %v131 = vadd.f32 %v50, %v130
    %v132 = vpop.f32.mrb[0].mxu0
    %133 = vdwg.mxu0
    %v134 = vld [vmem:[%s1] sm:$0xff]
    %v135 = vld [vmem:[%s1 + $0x8] sm:$0xff]
    %v136 = vld [vmem:[%s1 + $0x10] sm:$0xff]
    %v137 = vld [vmem:[%s1 + $0x18] sm:$0xff]
    %v138 = vld [vmem:[%s5] sm:$0xff]
    %v139 = vld [vmem:[%s5 + $0x8] sm:$0xff]
    %v140 = vld [vmem:[%s5 + $0x10] sm:$0xff]
    %v141 = vld [vmem:[%s5 + $0x18] sm:$0xff]
    %v142 = vld [vmem:[%s5 + $0x20] sm:$0xff]
    %v143 = vld [vmem:[%s5 + $0x28] sm:$0xff]
    %v144 = vld [vmem:[%s5 + $0x30] sm:$0xff]
    %v145 = vld [vmem:[%s5 + $0x38] sm:$0xff]
    %v146 = vld [vmem:[%s6] sm:$0x1]
    %v148 = vlaneseq
    %v149 = vshrl.u32 %v148, 7
    %v150 = vsub.s32 0, %v149
    %v151 = vrot.slane %v146, %v150
    %vm153 = vcmask 523264
    %v155 = vsel %vm153, %v134, 0
    %v158 = vsel %vm153, %v135, 0
    %v161 = vsel %vm153, %v136, 0
    %v164 = vsel %vm153, %v137, 0
    %166 = vmatprep.subr.mxu0 0.0
    %167 = vmatpush1.msra.mxu0 %v138
    %168 = vmatprep.subr.mxu0 0.0
    %169 = vmatpush1.msra.mxu0 %v139
    %170 = vmatprep.subr.mxu0 0.0
    %171 = vmatpush1.msra.mxu0 %v140
    %172 = vmatprep.subr.mxu0 0.0
    %173 = vmatpush1.msra.mxu0 %v141
    %174 = vmatprep.subr.mxu0 0.0
    %175 = vmatpush1.msra.mxu0 %v142
    %176 = vmatprep.subr.mxu0 0.0
    %177 = vmatpush1.msra.mxu0 %v143
    %178 = vmatprep.subr.mxu0 0.0
    %179 = vmatpush1.msra.mxu0 %v144
    %180 = vmatprep.subr.mxu0 0.0
    %181 = vmatpush1.msra.mxu0 %v145
    %182 = vmatprep.subr.mxu0 0.0
    %183 = vmatpush1.msra.mxu0 0.0
    %184 = vmatprep.subr.mxu0 0.0
    %185 = vmatpush1.msra.mxu0 0.0
    %186 = vmatprep.subr.mxu0 0.0
    %187 = vmatpush1.msra.mxu0 0.0
    %188 = vmatprep.subr.mxu0 0.0
    %189 = vmatpush1.msra.mxu0 0.0
    %190 = vmatprep.subr.mxu0 0.0
    %191 = vmatpush1.msra.mxu0 0.0
    %192 = vmatprep.subr.mxu0 0.0
    %193 = vmatpush1.msra.mxu0 0.0
    %194 = vmatprep.subr.mxu0 0.0
    %195 = vmatpush1.msra.mxu0 0.0
    %196 = vmatprep.subr.mxu0 0.0
    %197 = vmatpush1.msra.mxu0 0.0
    %198 = vmatprep.subr.mxu0 0.0
    %199 = vmatpush1.msra.mxu0 0.0
    %200 = vmatprep.subr.mxu0 0.0
    %201 = vmatpush1.msra.mxu0 0.0
    %202 = vmatprep.subr.mxu0 0.0
    %203 = vmatpush1.msra.mxu0 0.0
    %204 = vmatprep.subr.mxu0 0.0
    %205 = vmatpush1.msra.mxu0 0.0
    %206 = vmatprep.subr.mxu0 0.0
    %207 = vmatpush1.msra.mxu0 0.0
    %208 = vmatprep.subr.mxu0 0.0
    %209 = vmatpush1.msra.mxu0 0.0
    %210 = vmatprep.subr.mxu0 0.0
    %211 = vmatpush1.msra.mxu0 0.0
    %212 = vmatprep.subr.mxu0 0.0
    %213 = vmatpush1.msra.mxu0 0.0
    %214 = vmatprep.subr.mxu0 0.0
    %215 = vmatpush1.msra.mxu0 0.0
    %216 = vmatprep.subr.mxu0 0.0
    %217 = vmatpush1.msra.mxu0 0.0
    %218 = vmatprep.subr.mxu0 0.0
    %219 = vmatpush1.msra.mxu0 0.0
    %220 = vmatprep.subr.mxu0 0.0
    %221 = vmatpush1.msra.mxu0 0.0
    %222 = vmatprep.subr.mxu0 0.0
    %223 = vmatpush1.msra.mxu0 0.0
    %224 = vmatprep.subr.mxu0 0.0
    %225 = vmatpush1.msra.mxu0 0.0
    %226 = vmatprep.subr.mxu0 0.0
    %227 = vmatpush1.msra.mxu0 0.0
    %228 = vmatprep.subr.mxu0 0.0
    %229 = vmatpush1.msra.mxu0 0.0
    %230 = vmatprep.mubr.f32.mxu0 0.0
    %231 = vmatmul.mubr.f32.gmra.mrb[0].mxu0 %v155
    %v232 = vpop.f32.mrb[0].mxu0
    %v233 = vadd.f32 %v151, %v232
    %v234 = vpop.f32.mrb[0].mxu0
    %235 = vmatprep.mubr.f32.mxu0 0.0
    %236 = vmatmul.mubr.f32.gmra.mrb[0].mxu0 %v158
    %v237 = vpop.f32.mrb[0].mxu0
    %v238 = vadd.f32 %v151, %v237
    %v239 = vpop.f32.mrb[0].mxu0
    %240 = vmatprep.mubr.f32.mxu0 0.0
    %241 = vmatmul.mubr.f32.gmra.mrb[0].mxu0 %v161
    %v242 = vpop.f32.mrb[0].mxu0
    %v243 = vadd.f32 %v151, %v242
    %v244 = vpop.f32.mrb[0].mxu0
    %245 = vmatprep.mubr.f32.mxu0 0.0
    %246 = vmatmul.mubr.f32.gmra.mrb[0].mxu0 %v164
    %v247 = vpop.f32.mrb[0].mxu0
    %v248 = vadd.f32 %v151, %v247
    %v249 = vpop.f32.mrb[0].mxu0
    %250 = vdwg.mxu0
    %v251 = vld [vmem:[%s2] sm:$0xff]
    %v252 = vld [vmem:[%s2 + $0x8] sm:$0xff]
    %v253 = vld [vmem:[%s2 + $0x10] sm:$0xff]
    %v254 = vld [vmem:[%s2 + $0x18] sm:$0xff]
    %v255 = vld [vmem:[%s7] sm:$0xff]
    %v256 = vld [vmem:[%s7 + $0x8] sm:$0xff]
    %v257 = vld [vmem:[%s7 + $0x10] sm:$0xff]
    %v258 = vld [vmem:[%s7 + $0x18] sm:$0xff]
    %v259 = vld [vmem:[%s7 + $0x20] sm:$0xff]
    %v260 = vld [vmem:[%s7 + $0x28] sm:$0xff]
    %v261 = vld [vmem:[%s7 + $0x30] sm:$0xff]
    %v262 = vld [vmem:[%s7 + $0x38] sm:$0xff]
    %v263 = vld [vmem:[%s8] sm:$0x1]
    %v265 = vlaneseq
    %v266 = vshrl.u32 %v265, 7
    %v267 = vsub.s32 0, %v266
    %v268 = vrot.slane %v263, %v267
    %v271 = vsel %vm153, %v251, 0
    %v274 = vsel %vm153, %v252, 0
    %v277 = vsel %vm153, %v253, 0
    %v280 = vsel %vm153, %v254, 0
    %282 = vmatprep.subr.mxu0 0.0
    %283 = vmatpush1.msra.mxu0 %v255
    %284 = vmatprep.subr.mxu0 0.0
    %285 = vmatpush1.msra.mxu0 %v256
    %286 = vmatprep.subr.mxu0 0.0
    %287 = vmatpush1.msra.mxu0 %v257
    %288 = vmatprep.subr.mxu0 0.0
    %289 = vmatpush1.msra.mxu0 %v258
    %290 = vmatprep.subr.mxu0 0.0
    %291 = vmatpush1.msra.mxu0 %v259
    %292 = vmatprep.subr.mxu0 0.0
    %293 = vmatpush1.msra.mxu0 %v260
    %294 = vmatprep.subr.mxu0 0.0
    %295 = vmatpush1.msra.mxu0 %v261
    %296 = vmatprep.subr.mxu0 0.0
    %297 = vmatpush1.msra.mxu0 %v262
    %298 = vmatprep.subr.mxu0 0.0
    %299 = vmatpush1.msra.mxu0 0.0
    %300 = vmatprep.subr.mxu0 0.0
    %301 = vmatpush1.msra.mxu0 0.0
    %302 = vmatprep.subr.mxu0 0.0
    %303 = vmatpush1.msra.mxu0 0.0
    %304 = vmatprep.subr.mxu0 0.0
    %305 = vmatpush1.msra.mxu0 0.0
    %306 = vmatprep.subr.mxu0 0.0
    %307 = vmatpush1.msra.mxu0 0.0
    %308 = vmatprep.subr.mxu0 0.0
    %309 = vmatpush1.msra.mxu0 0.0
    %310 = vmatprep.subr.mxu0 0.0
    %311 = vmatpush1.msra.mxu0 0.0
    %312 = vmatprep.subr.mxu0 0.0
    %313 = vmatpush1.msra.mxu0 0.0
    %314 = vmatprep.subr.mxu0 0.0
    %315 = vmatpush1.msra.mxu0 0.0
    %316 = vmatprep.subr.mxu0 0.0
    %317 = vmatpush1.msra.mxu0 0.0
    %318 = vmatprep.subr.mxu0 0.0
    %319 = vmatpush1.msra.mxu0 0.0
    %320 = vmatprep.subr.mxu0 0.0
    %321 = vmatpush1.msra.mxu0 0.0
    %322 = vmatprep.subr.mxu0 0.0
    %323 = vmatpush1.msra.mxu0 0.0
    %324 = vmatprep.subr.mxu0 0.0
    %325 = vmatpush1.msra.mxu0 0.0
    %326 = vmatprep.subr.mxu0 0.0
    %327 = vmatpush1.msra.mxu0 0.0
    %328 = vmatprep.subr.mxu0 0.0
    %329 = vmatpush1.msra.mxu0 0.0
    %330 = vmatprep.subr.mxu0 0.0
    %331 = vmatpush1.msra.mxu0 0.0
    %332 = vmatprep.subr.mxu0 0.0
    %333 = vmatpush1.msra.mxu0 0.0
    %334 = vmatprep.subr.mxu0 0.0
    %335 = vmatpush1.msra.mxu0 0.0
    %336 = vmatprep.subr.mxu0 0.0
    %337 = vmatpush1.msra.mxu0 0.0
    %338 = vmatprep.subr.mxu0 0.0
    %339 = vmatpush1.msra.mxu0 0.0
    %340 = vmatprep.subr.mxu0 0.0
    %341 = vmatpush1.msra.mxu0 0.0
    %342 = vmatprep.subr.mxu0 0.0
    %343 = vmatpush1.msra.mxu0 0.0
    %344 = vmatprep.subr.mxu0 0.0
    %345 = vmatpush1.msra.mxu0 0.0
    %346 = vmatprep.mubr.f32.mxu0 0.0
    %347 = vmatmul.mubr.f32.gmra.mrb[0].mxu0 %v271
    %v348 = vpop.f32.mrb[0].mxu0
    %v349 = vadd.f32 %v268, %v348
    %v350 = vpop.f32.mrb[0].mxu0
    %351 = vmatprep.mubr.f32.mxu0 0.0
    %352 = vmatmul.mubr.f32.gmra.mrb[0].mxu0 %v274
    %v353 = vpop.f32.mrb[0].mxu0
    %v354 = vadd.f32 %v268, %v353
    %v355 = vpop.f32.mrb[0].mxu0
    %356 = vmatprep.mubr.f32.mxu0 0.0
    %357 = vmatmul.mubr.f32.gmra.mrb[0].mxu0 %v277
    %v358 = vpop.f32.mrb[0].mxu0
    %v359 = vadd.f32 %v268, %v358
    %v360 = vpop.f32.mrb[0].mxu0
    %361 = vmatprep.mubr.f32.mxu0 0.0
    %362 = vmatmul.mubr.f32.gmra.mrb[0].mxu0 %v280
    %v363 = vpop.f32.mrb[0].mxu0
    %v364 = vadd.f32 %v268, %v363
    %v365 = vpop.f32.mrb[0].mxu0
    %366 = vdwg.mxu0
    %vm367 = vcmask 64512
    %v369 = vsel %vm367, %v126, 0
    %v372 = vsel %vm367, %v233, 0
    %v375 = vsel %vm367, %v238, 0
    %377 = vmatprep.subr.mxu0 0.0
    %378 = vmatpush1.xpose.msra.mxu0 %v372
    %379 = vmatprep.subr.mxu0 0.0
    %380 = vmatpush1.xpose.msra.mxu0 %v375
    %381 = vmatprep.subr.mxu0 0.0
    %382 = vmatpush1.xpose.msra.mxu0 0.0
    %383 = vmatprep.subr.mxu0 0.0
    %384 = vmatpush1.xpose.msra.mxu0 0.0
    %385 = vmatprep.subr.mxu0 0.0
    %386 = vmatpush1.xpose.msra.mxu0 0.0
    %387 = vmatprep.subr.mxu0 0.0
    %388 = vmatpush1.xpose.msra.mxu0 0.0
    %389 = vmatprep.subr.mxu0 0.0
    %390 = vmatpush1.xpose.msra.mxu0 0.0
    %391 = vmatprep.subr.mxu0 0.0
    %392 = vmatpush1.xpose.msra.mxu0 0.0
    %393 = vmatprep.subr.mxu0 0.0
    %394 = vmatpush1.xpose.msra.mxu0 0.0
    %395 = vmatprep.subr.mxu0 0.0
    %396 = vmatpush1.xpose.msra.mxu0 0.0
    %397 = vmatprep.subr.mxu0 0.0
    %398 = vmatpush1.xpose.msra.mxu0 0.0
    %399 = vmatprep.subr.mxu0 0.0
    %400 = vmatpush1.xpose.msra.mxu0 0.0
    %401 = vmatprep.subr.mxu0 0.0
    %402 = vmatpush1.xpose.msra.mxu0 0.0
    %403 = vmatprep.subr.mxu0 0.0
    %404 = vmatpush1.xpose.msra.mxu0 0.0
    %405 = vmatprep.subr.mxu0 0.0
    %406 = vmatpush1.xpose.msra.mxu0 0.0
    %407 = vmatprep.subr.mxu0 0.0
    %408 = vmatpush1.xpose.msra.mxu0 0.0
    %409 = vmatprep.subr.mxu0 0.0
    %410 = vmatpush1.xpose.msra.mxu0 0.0
    %411 = vmatprep.subr.mxu0 0.0
    %412 = vmatpush1.xpose.msra.mxu0 0.0
    %413 = vmatprep.subr.mxu0 0.0
    %414 = vmatpush1.xpose.msra.mxu0 0.0
    %415 = vmatprep.subr.mxu0 0.0
    %416 = vmatpush1.xpose.msra.mxu0 0.0
    %417 = vmatprep.subr.mxu0 0.0
    %418 = vmatpush1.xpose.msra.mxu0 0.0
    %419 = vmatprep.subr.mxu0 0.0
    %420 = vmatpush1.xpose.msra.mxu0 0.0
    %421 = vmatprep.subr.mxu0 0.0
    %422 = vmatpush1.xpose.msra.mxu0 0.0
    %423 = vmatprep.subr.mxu0 0.0
    %424 = vmatpush1.xpose.msra.mxu0 0.0
    %425 = vmatprep.subr.mxu0 0.0
    %426 = vmatpush1.xpose.msra.mxu0 0.0
    %427 = vmatprep.subr.mxu0 0.0
    %428 = vmatpush1.xpose.msra.mxu0 0.0
    %429 = vmatprep.subr.mxu0 0.0
    %430 = vmatpush1.xpose.msra.mxu0 0.0
    %431 = vmatprep.subr.mxu0 0.0
    %432 = vmatpush1.xpose.msra.mxu0 0.0
    %433 = vmatprep.subr.mxu0 0.0
    %434 = vmatpush1.xpose.msra.mxu0 0.0
    %435 = vmatprep.subr.mxu0 0.0
    %436 = vmatpush1.xpose.msra.mxu0 0.0
    %437 = vmatprep.subr.mxu0 0.0
    %438 = vmatpush1.xpose.msra.mxu0 0.0
    %439 = vmatprep.subr.mxu0 0.0
    %440 = vmatpush1.xpose.msra.mxu0 0.0
    %441 = vmatprep.mubr.f32.mxu0 0.0
    %442 = vmatmul.mubr.f32.gmra.mrb[0].mxu0 %v369
    %v443 = vpop.f32.mrb[0].mxu0
    %v444 = vadd.f32 0.0, %v443
    %v445 = vpop.f32.mrb[0].mxu0
    %446 = vdwg.mxu0
    %v448 = vsel %vm367, %v131, 0
    %v451 = vsel %vm367, %v243, 0
    %v454 = vsel %vm367, %v248, 0
    %456 = vmatprep.subr.mxu0 0.0
    %457 = vmatpush1.xpose.msra.mxu0 %v451
    %458 = vmatprep.subr.mxu0 0.0
    %459 = vmatpush1.xpose.msra.mxu0 %v454
    %460 = vmatprep.subr.mxu0 0.0
    %461 = vmatpush1.xpose.msra.mxu0 0.0
    %462 = vmatprep.subr.mxu0 0.0
    %463 = vmatpush1.xpose.msra.mxu0 0.0
    %464 = vmatprep.subr.mxu0 0.0
    %465 = vmatpush1.xpose.msra.mxu0 0.0
    %466 = vmatprep.subr.mxu0 0.0
    %467 = vmatpush1.xpose.msra.mxu0 0.0
    %468 = vmatprep.subr.mxu0 0.0
    %469 = vmatpush1.xpose.msra.mxu0 0.0
    %470 = vmatprep.subr.mxu0 0.0
    %471 = vmatpush1.xpose.msra.mxu0 0.0
    %472 = vmatprep.subr.mxu0 0.0
    %473 = vmatpush1.xpose.msra.mxu0 0.0
    %474 = vmatprep.subr.mxu0 0.0
    %475 = vmatpush1.xpose.msra.mxu0 0.0
    %476 = vmatprep.subr.mxu0 0.0
    %477 = vmatpush1.xpose.msra.mxu0 0.0
    %478 = vmatprep.subr.mxu0 0.0
    %479 = vmatpush1.xpose.msra.mxu0 0.0
    %480 = vmatprep.subr.mxu0 0.0
    %481 = vmatpush1.xpose.msra.mxu0 0.0
    %482 = vmatprep.subr.mxu0 0.0
    %483 = vmatpush1.xpose.msra.mxu0 0.0
    %484 = vmatprep.subr.mxu0 0.0
    %485 = vmatpush1.xpose.msra.mxu0 0.0
    %486 = vmatprep.subr.mxu0 0.0
    %487 = vmatpush1.xpose.msra.mxu0 0.0
    %488 = vmatprep.subr.mxu0 0.0
    %489 = vmatpush1.xpose.msra.mxu0 0.0
    %490 = vmatprep.subr.mxu0 0.0
    %491 = vmatpush1.xpose.msra.mxu0 0.0
    %492 = vmatprep.subr.mxu0 0.0
    %493 = vmatpush1.xpose.msra.mxu0 0.0
    %494 = vmatprep.subr.mxu0 0.0
    %495 = vmatpush1.xpose.msra.mxu0 0.0
    %496 = vmatprep.subr.mxu0 0.0
    %497 = vmatpush1.xpose.msra.mxu0 0.0
    %498 = vmatprep.subr.mxu0 0.0
    %499 = vmatpush1.xpose.msra.mxu0 0.0
    %500 = vmatprep.subr.mxu0 0.0
    %501 = vmatpush1.xpose.msra.mxu0 0.0
    %502 = vmatprep.subr.mxu0 0.0
    %503 = vmatpush1.xpose.msra.mxu0 0.0
    %504 = vmatprep.subr.mxu0 0.0
    %505 = vmatpush1.xpose.msra.mxu0 0.0
    %506 = vmatprep.subr.mxu0 0.0
    %507 = vmatpush1.xpose.msra.mxu0 0.0
    %508 = vmatprep.subr.mxu0 0.0
    %509 = vmatpush1.xpose.msra.mxu0 0.0
    %510 = vmatprep.subr.mxu0 0.0
    %511 = vmatpush1.xpose.msra.mxu0 0.0
    %512 = vmatprep.subr.mxu0 0.0
    %513 = vmatpush1.xpose.msra.mxu0 0.0
    %514 = vmatprep.subr.mxu0 0.0
    %515 = vmatpush1.xpose.msra.mxu0 0.0
    %516 = vmatprep.subr.mxu0 0.0
    %517 = vmatpush1.xpose.msra.mxu0 0.0
    %518 = vmatprep.subr.mxu0 0.0
    %519 = vmatpush1.xpose.msra.mxu0 0.0
    %520 = vmatprep.mubr.f32.mxu0 0.0
    %521 = vmatmul.mubr.f32.gmra.mrb[0].mxu0 %v448
    %v522 = vpop.f32.mrb[0].mxu0
    %v523 = vadd.f32 0.0, %v522
    %v524 = vpop.f32.mrb[0].mxu0
    %525 = vdwg.mxu0
    %vm526 = vcmask 130048
    %v527 = vsel %vm526, %v444, -inf
    %528 = vmax.xlane.f32.xlu0 %v527
    %v529 = vpop.xlane.xlu0 %528
    %v530 = vsel %vm526, %v523, -inf
    %531 = vmax.xlane.f32.xlu0 %v530
    %v532 = vpop.xlane.xlu0 %531
    %v533 = vsub.f32 %v444, %v529
    %v534 = vsub.f32 %v523, %v532
    %v535 = vmul.f32 %v533, 1.442695
    %v536 = vpow.pop %v535
    %v537 = vmul.f32 %v534, 1.442695
    %v538 = vpow.pop %v537
    %v539 = vsel %vm526, %v536, 0.0
    %540 = vadd.xlane.f32.xlu0 %v539
    %v541 = vpop.xlane.xlu0 %540
    %v542 = vsel %vm526, %v538, 0.0
    %543 = vadd.xlane.f32.xlu0 %v542
    %v544 = vpop.xlane.xlu0 %543
    %v545 = vrcp.pop %v541
    %v546 = vmul.f32 %v536, %v545
    %v547 = vrcp.pop %v544
    %v548 = vmul.f32 %v538, %v547
    %v550 = vsel %vm526, %v546, 0
    %552 = vmatprep.subr.mxu0 0.0
    %553 = vmatpush1.msra.mxu0 %v349
    %554 = vmatprep.subr.mxu0 0.0
    %555 = vmatpush1.msra.mxu0 %v354
    %556 = vmatprep.subr.mxu0 0.0
    %557 = vmatpush1.msra.mxu0 0.0
    %558 = vmatprep.subr.mxu0 0.0
    %559 = vmatpush1.msra.mxu0 0.0
    %560 = vmatprep.subr.mxu0 0.0
    %561 = vmatpush1.msra.mxu0 0.0
    %562 = vmatprep.subr.mxu0 0.0
    %563 = vmatpush1.msra.mxu0 0.0
    %564 = vmatprep.subr.mxu0 0.0
    %565 = vmatpush1.msra.mxu0 0.0
    %566 = vmatprep.subr.mxu0 0.0
    %567 = vmatpush1.msra.mxu0 0.0
    %568 = vmatprep.subr.mxu0 0.0
    %569 = vmatpush1.msra.mxu0 0.0
    %570 = vmatprep.subr.mxu0 0.0
    %571 = vmatpush1.msra.mxu0 0.0
    %572 = vmatprep.subr.mxu0 0.0
    %573 = vmatpush1.msra.mxu0 0.0
    %574 = vmatprep.subr.mxu0 0.0
    %575 = vmatpush1.msra.mxu0 0.0
    %576 = vmatprep.subr.mxu0 0.0
    %577 = vmatpush1.msra.mxu0 0.0
    %578 = vmatprep.subr.mxu0 0.0
    %579 = vmatpush1.msra.mxu0 0.0
    %580 = vmatprep.subr.mxu0 0.0
    %581 = vmatpush1.msra.mxu0 0.0
    %582 = vmatprep.subr.mxu0 0.0
    %583 = vmatpush1.msra.mxu0 0.0
    %584 = vmatprep.subr.mxu0 0.0
    %585 = vmatpush1.msra.mxu0 0.0
    %586 = vmatprep.subr.mxu0 0.0
    %587 = vmatpush1.msra.mxu0 0.0
    %588 = vmatprep.subr.mxu0 0.0
    %589 = vmatpush1.msra.mxu0 0.0
    %590 = vmatprep.subr.mxu0 0.0
    %591 = vmatpush1.msra.mxu0 0.0
    %592 = vmatprep.subr.mxu0 0.0
    %593 = vmatpush1.msra.mxu0 0.0
    %594 = vmatprep.subr.mxu0 0.0
    %595 = vmatpush1.msra.mxu0 0.0
    %596 = vmatprep.subr.mxu0 0.0
    %597 = vmatpush1.msra.mxu0 0.0
    %598 = vmatprep.subr.mxu0 0.0
    %599 = vmatpush1.msra.mxu0 0.0
    %600 = vmatprep.subr.mxu0 0.0
    %601 = vmatpush1.msra.mxu0 0.0
    %602 = vmatprep.subr.mxu0 0.0
    %603 = vmatpush1.msra.mxu0 0.0
    %604 = vmatprep.subr.mxu0 0.0
    %605 = vmatpush1.msra.mxu0 0.0
    %606 = vmatprep.subr.mxu0 0.0
    %607 = vmatpush1.msra.mxu0 0.0
    %608 = vmatprep.subr.mxu0 0.0
    %609 = vmatpush1.msra.mxu0 0.0
    %610 = vmatprep.subr.mxu0 0.0
    %611 = vmatpush1.msra.mxu0 0.0
    %612 = vmatprep.subr.mxu0 0.0
    %613 = vmatpush1.msra.mxu0 0.0
    %614 = vmatprep.subr.mxu0 0.0
    %615 = vmatpush1.msra.mxu0 0.0
    %616 = vmatprep.mubr.f32.mxu0 0.0
    %617 = vmatmul.mubr.f32.gmra.mrb[0].mxu0 %v550
    %v618 = vpop.f32.mrb[0].mxu0
    %v619 = vadd.f32 0.0, %v618
    %v620 = vpop.f32.mrb[0].mxu0
    %621 = vdwg.mxu0
    %v623 = vsel %vm526, %v548, 0
    %625 = vmatprep.subr.mxu0 0.0
    %626 = vmatpush1.msra.mxu0 %v359
    %627 = vmatprep.subr.mxu0 0.0
    %628 = vmatpush1.msra.mxu0 %v364
    %629 = vmatprep.subr.mxu0 0.0
    %630 = vmatpush1.msra.mxu0 0.0
    %631 = vmatprep.subr.mxu0 0.0
    %632 = vmatpush1.msra.mxu0 0.0
    %633 = vmatprep.subr.mxu0 0.0
    %634 = vmatpush1.msra.mxu0 0.0
    %635 = vmatprep.subr.mxu0 0.0
    %636 = vmatpush1.msra.mxu0 0.0
    %637 = vmatprep.subr.mxu0 0.0
    %638 = vmatpush1.msra.mxu0 0.0
    %639 = vmatprep.subr.mxu0 0.0
    %640 = vmatpush1.msra.mxu0 0.0
    %641 = vmatprep.subr.mxu0 0.0
    %642 = vmatpush1.msra.mxu0 0.0
    %643 = vmatprep.subr.mxu0 0.0
    %644 = vmatpush1.msra.mxu0 0.0
    %645 = vmatprep.subr.mxu0 0.0
    %646 = vmatpush1.msra.mxu0 0.0
    %647 = vmatprep.subr.mxu0 0.0
    %648 = vmatpush1.msra.mxu0 0.0
    %649 = vmatprep.subr.mxu0 0.0
    %650 = vmatpush1.msra.mxu0 0.0
    %651 = vmatprep.subr.mxu0 0.0
    %652 = vmatpush1.msra.mxu0 0.0
    %653 = vmatprep.subr.mxu0 0.0
    %654 = vmatpush1.msra.mxu0 0.0
    %655 = vmatprep.subr.mxu0 0.0
    %656 = vmatpush1.msra.mxu0 0.0
    %657 = vmatprep.subr.mxu0 0.0
    %658 = vmatpush1.msra.mxu0 0.0
    %659 = vmatprep.subr.mxu0 0.0
    %660 = vmatpush1.msra.mxu0 0.0
    %661 = vmatprep.subr.mxu0 0.0
    %662 = vmatpush1.msra.mxu0 0.0
    %663 = vmatprep.subr.mxu0 0.0
    %664 = vmatpush1.msra.mxu0 0.0
    %665 = vmatprep.subr.mxu0 0.0
    %666 = vmatpush1.msra.mxu0 0.0
    %667 = vmatprep.subr.mxu0 0.0
    %668 = vmatpush1.msra.mxu0 0.0
    %669 = vmatprep.subr.mxu0 0.0
    %670 = vmatpush1.msra.mxu0 0.0
    %671 = vmatprep.subr.mxu0 0.0
    %672 = vmatpush1.msra.mxu0 0.0
    %673 = vmatprep.subr.mxu0 0.0
    %674 = vmatpush1.msra.mxu0 0.0
    %675 = vmatprep.subr.mxu0 0.0
    %676 = vmatpush1.msra.mxu0 0.0
    %677 = vmatprep.subr.mxu0 0.0
    %678 = vmatpush1.msra.mxu0 0.0
    %679 = vmatprep.subr.mxu0 0.0
    %680 = vmatpush1.msra.mxu0 0.0
    %681 = vmatprep.subr.mxu0 0.0
    %682 = vmatpush1.msra.mxu0 0.0
    %683 = vmatprep.subr.mxu0 0.0
    %684 = vmatpush1.msra.mxu0 0.0
    %685 = vmatprep.subr.mxu0 0.0
    %686 = vmatpush1.msra.mxu0 0.0
    %687 = vmatprep.subr.mxu0 0.0
    %688 = vmatpush1.msra.mxu0 0.0
    %689 = vmatprep.mubr.f32.mxu0 0.0
    %690 = vmatmul.mubr.f32.gmra.mrb[0].mxu0 %v623
    %v691 = vpop.f32.mrb[0].mxu0
    %v692 = vadd.f32 0.0, %v691
    %v693 = vpop.f32.mrb[0].mxu0
    %694 = vdwg.mxu0
    %v695 = vld [vmem:[%s9] sm:$0xff]
    %696 = vrot.lane.b32.xlu0 %v126, 120
    %v697 = vpop.permute.xlu0 %696
    %698 = vrot.lane.b32.xlu0 %v233, 120
    %v699 = vpop.permute.xlu0 %698
    %700 = vrot.lane.b32.xlu0 %v238, 120
    %v701 = vpop.permute.xlu0 %700
    %v702 = vsel %vm367, %v697, 0
    %v704 = vsel %vm367, %v699, 0
    %v706 = vsel %vm367, %v701, 0
    %708 = vmatprep.subr.mxu0 0.0
    %709 = vmatpush1.xpose.msra.mxu0 %v704
    %710 = vmatprep.subr.mxu0 0.0
    %711 = vmatpush1.xpose.msra.mxu0 %v706
    %712 = vmatprep.subr.mxu0 0.0
    %713 = vmatpush1.xpose.msra.mxu0 0.0
    %714 = vmatprep.subr.mxu0 0.0
    %715 = vmatpush1.xpose.msra.mxu0 0.0
    %716 = vmatprep.subr.mxu0 0.0
    %717 = vmatpush1.xpose.msra.mxu0 0.0
    %718 = vmatprep.subr.mxu0 0.0
    %719 = vmatpush1.xpose.msra.mxu0 0.0
    %720 = vmatprep.subr.mxu0 0.0
    %721 = vmatpush1.xpose.msra.mxu0 0.0
    %722 = vmatprep.subr.mxu0 0.0
    %723 = vmatpush1.xpose.msra.mxu0 0.0
    %724 = vmatprep.subr.mxu0 0.0
    %725 = vmatpush1.xpose.msra.mxu0 0.0
    %726 = vmatprep.subr.mxu0 0.0
    %727 = vmatpush1.xpose.msra.mxu0 0.0
    %728 = vmatprep.subr.mxu0 0.0
    %729 = vmatpush1.xpose.msra.mxu0 0.0
    %730 = vmatprep.subr.mxu0 0.0
    %731 = vmatpush1.xpose.msra.mxu0 0.0
    %732 = vmatprep.subr.mxu0 0.0
    %733 = vmatpush1.xpose.msra.mxu0 0.0
    %734 = vmatprep.subr.mxu0 0.0
    %735 = vmatpush1.xpose.msra.mxu0 0.0
    %736 = vmatprep.subr.mxu0 0.0
    %737 = vmatpush1.xpose.msra.mxu0 0.0
    %738 = vmatprep.subr.mxu0 0.0
    %739 = vmatpush1.xpose.msra.mxu0 0.0
    %740 = vmatprep.subr.mxu0 0.0
    %741 = vmatpush1.xpose.msra.mxu0 0.0
    %742 = vmatprep.subr.mxu0 0.0
    %743 = vmatpush1.xpose.msra.mxu0 0.0
    %744 = vmatprep.subr.mxu0 0.0
    %745 = vmatpush1.xpose.msra.mxu0 0.0
    %746 = vmatprep.subr.mxu0 0.0
    %747 = vmatpush1.xpose.msra.mxu0 0.0
    %748 = vmatprep.subr.mxu0 0.0
    %749 = vmatpush1.xpose.msra.mxu0 0.0
    %750 = vmatprep.subr.mxu0 0.0
    %751 = vmatpush1.xpose.msra.mxu0 0.0
    %752 = vmatprep.subr.mxu0 0.0
    %753 = vmatpush1.xpose.msra.mxu0 0.0
    %754 = vmatprep.subr.mxu0 0.0
    %755 = vmatpush1.xpose.msra.mxu0 0.0
    %756 = vmatprep.subr.mxu0 0.0
    %757 = vmatpush1.xpose.msra.mxu0 0.0
    %758 = vmatprep.subr.mxu0 0.0
    %759 = vmatpush1.xpose.msra.mxu0 0.0
    %760 = vmatprep.subr.mxu0 0.0
    %761 = vmatpush1.xpose.msra.mxu0 0.0
    %762 = vmatprep.subr.mxu0 0.0
    %763 = vmatpush1.xpose.msra.mxu0 0.0
    %764 = vmatprep.subr.mxu0 0.0
    %765 = vmatpush1.xpose.msra.mxu0 0.0
    %766 = vmatprep.subr.mxu0 0.0
    %767 = vmatpush1.xpose.msra.mxu0 0.0
    %768 = vmatprep.subr.mxu0 0.0
    %769 = vmatpush1.xpose.msra.mxu0 0.0
    %770 = vmatprep.subr.mxu0 0.0
    %771 = vmatpush1.xpose.msra.mxu0 0.0
    %772 = vmatprep.mubr.f32.mxu0 0.0
    %773 = vmatmul.mubr.f32.gmra.mrb[0].mxu0 %v702
    %v774 = vpop.f32.mrb[0].mxu0
    %v775 = vadd.f32 0.0, %v774
    %v776 = vpop.f32.mrb[0].mxu0
    %777 = vdwg.mxu0
    %778 = vrot.lane.b32.xlu0 %v131, 120
    %v779 = vpop.permute.xlu0 %778
    %780 = vrot.lane.b32.xlu0 %v243, 120
    %v781 = vpop.permute.xlu0 %780
    %782 = vrot.lane.b32.xlu0 %v248, 120
    %v783 = vpop.permute.xlu0 %782
    %v784 = vsel %vm367, %v779, 0
    %v786 = vsel %vm367, %v781, 0
    %v788 = vsel %vm367, %v783, 0
    %790 = vmatprep.subr.mxu0 0.0
    %791 = vmatpush1.xpose.msra.mxu0 %v786
    %792 = vmatprep.subr.mxu0 0.0
    %793 = vmatpush1.xpose.msra.mxu0 %v788
    %794 = vmatprep.subr.mxu0 0.0
    %795 = vmatpush1.xpose.msra.mxu0 0.0
    %796 = vmatprep.subr.mxu0 0.0
    %797 = vmatpush1.xpose.msra.mxu0 0.0
    %798 = vmatprep.subr.mxu0 0.0
    %799 = vmatpush1.xpose.msra.mxu0 0.0
    %800 = vmatprep.subr.mxu0 0.0
    %801 = vmatpush1.xpose.msra.mxu0 0.0
    %802 = vmatprep.subr.mxu0 0.0
    %803 = vmatpush1.xpose.msra.mxu0 0.0
    %804 = vmatprep.subr.mxu0 0.0
    %805 = vmatpush1.xpose.msra.mxu0 0.0
    %806 = vmatprep.subr.mxu0 0.0
    %807 = vmatpush1.xpose.msra.mxu0 0.0
    %808 = vmatprep.subr.mxu0 0.0
    %809 = vmatpush1.xpose.msra.mxu0 0.0
    %810 = vmatprep.subr.mxu0 0.0
    %811 = vmatpush1.xpose.msra.mxu0 0.0
    %812 = vmatprep.subr.mxu0 0.0
    %813 = vmatpush1.xpose.msra.mxu0 0.0
    %814 = vmatprep.subr.mxu0 0.0
    %815 = vmatpush1.xpose.msra.mxu0 0.0
    %816 = vmatprep.subr.mxu0 0.0
    %817 = vmatpush1.xpose.msra.mxu0 0.0
    %818 = vmatprep.subr.mxu0 0.0
    %819 = vmatpush1.xpose.msra.mxu0 0.0
    %820 = vmatprep.subr.mxu0 0.0
    %821 = vmatpush1.xpose.msra.mxu0 0.0
    %822 = vmatprep.subr.mxu0 0.0
    %823 = vmatpush1.xpose.msra.mxu0 0.0
    %824 = vmatprep.subr.mxu0 0.0
    %825 = vmatpush1.xpose.msra.mxu0 0.0
    %826 = vmatprep.subr.mxu0 0.0
    %827 = vmatpush1.xpose.msra.mxu0 0.0
    %828 = vmatprep.subr.mxu0 0.0
    %829 = vmatpush1.xpose.msra.mxu0 0.0
    %830 = vmatprep.subr.mxu0 0.0
    %831 = vmatpush1.xpose.msra.mxu0 0.0
    %832 = vmatprep.subr.mxu0 0.0
    %833 = vmatpush1.xpose.msra.mxu0 0.0
    %834 = vmatprep.subr.mxu0 0.0
    %835 = vmatpush1.xpose.msra.mxu0 0.0
    %836 = vmatprep.subr.mxu0 0.0
    %837 = vmatpush1.xpose.msra.mxu0 0.0
    %838 = vmatprep.subr.mxu0 0.0
    %839 = vmatpush1.xpose.msra.mxu0 0.0
    %840 = vmatprep.subr.mxu0 0.0
    %841 = vmatpush1.xpose.msra.mxu0 0.0
    %842 = vmatprep.subr.mxu0 0.0
    %843 = vmatpush1.xpose.msra.mxu0 0.0
    %844 = vmatprep.subr.mxu0 0.0
    %845 = vmatpush1.xpose.msra.mxu0 0.0
    %846 = vmatprep.subr.mxu0 0.0
    %847 = vmatpush1.xpose.msra.mxu0 0.0
    %848 = vmatprep.subr.mxu0 0.0
    %849 = vmatpush1.xpose.msra.mxu0 0.0
    %850 = vmatprep.subr.mxu0 0.0
    %851 = vmatpush1.xpose.msra.mxu0 0.0
    %852 = vmatprep.subr.mxu0 0.0
    %853 = vmatpush1.xpose.msra.mxu0 0.0
    %854 = vmatprep.mubr.f32.mxu0 0.0
    %855 = vmatmul.mubr.f32.gmra.mrb[0].mxu0 %v784
    %v856 = vpop.f32.mrb[0].mxu0
    %v857 = vadd.f32 0.0, %v856
    %v858 = vpop.f32.mrb[0].mxu0
    %859 = vdwg.mxu0
    %v860 = vsel %vm526, %v775, -inf
    %861 = vmax.xlane.f32.xlu0 %v860
    %v862 = vpop.xlane.xlu0 %861
    %v863 = vsel %vm526, %v857, -inf
    %864 = vmax.xlane.f32.xlu0 %v863
    %v865 = vpop.xlane.xlu0 %864
    %v866 = vsub.f32 %v775, %v862
    %v867 = vsub.f32 %v857, %v865
    %v868 = vmul.f32 %v866, 1.442695
    %v869 = vpow.pop %v868
    %v870 = vmul.f32 %v867, 1.442695
    %v871 = vpow.pop %v870
    %v872 = vsel %vm526, %v869, 0.0
    %873 = vadd.xlane.f32.xlu0 %v872
    %v874 = vpop.xlane.xlu0 %873
    %v875 = vsel %vm526, %v871, 0.0
    %876 = vadd.xlane.f32.xlu0 %v875
    %v877 = vpop.xlane.xlu0 %876
    %v878 = vrcp.pop %v874
    %v879 = vmul.f32 %v869, %v878
    %v880 = vrcp.pop %v877
    %v881 = vmul.f32 %v871, %v880
    %884 = vrot.lane.b32.xlu0 %v349, 120
    %v885 = vpop.permute.xlu0 %884
    %886 = vrot.lane.b32.xlu0 %v354, 120
    %v887 = vpop.permute.xlu0 %886
    %v891 = vsel %vm526, %v879, 0
    %893 = vmatprep.subr.mxu0 0.0
    %894 = vmatpush1.msra.mxu0 %v885
    %895 = vmatprep.subr.mxu0 0.0
    %896 = vmatpush1.msra.mxu0 %v887
    %897 = vmatprep.subr.mxu0 0.0
    %898 = vmatpush1.msra.mxu0 0.0
    %899 = vmatprep.subr.mxu0 0.0
    %900 = vmatpush1.msra.mxu0 0.0
    %901 = vmatprep.subr.mxu0 0.0
    %902 = vmatpush1.msra.mxu0 0.0
    %903 = vmatprep.subr.mxu0 0.0
    %904 = vmatpush1.msra.mxu0 0.0
    %905 = vmatprep.subr.mxu0 0.0
    %906 = vmatpush1.msra.mxu0 0.0
    %907 = vmatprep.subr.mxu0 0.0
    %908 = vmatpush1.msra.mxu0 0.0
    %909 = vmatprep.subr.mxu0 0.0
    %910 = vmatpush1.msra.mxu0 0.0
    %911 = vmatprep.subr.mxu0 0.0
    %912 = vmatpush1.msra.mxu0 0.0
    %913 = vmatprep.subr.mxu0 0.0
    %914 = vmatpush1.msra.mxu0 0.0
    %915 = vmatprep.subr.mxu0 0.0
    %916 = vmatpush1.msra.mxu0 0.0
    %917 = vmatprep.subr.mxu0 0.0
    %918 = vmatpush1.msra.mxu0 0.0
    %919 = vmatprep.subr.mxu0 0.0
    %920 = vmatpush1.msra.mxu0 0.0
    %921 = vmatprep.subr.mxu0 0.0
    %922 = vmatpush1.msra.mxu0 0.0
    %923 = vmatprep.subr.mxu0 0.0
    %924 = vmatpush1.msra.mxu0 0.0
    %925 = vmatprep.subr.mxu0 0.0
    %926 = vmatpush1.msra.mxu0 0.0
    %927 = vmatprep.subr.mxu0 0.0
    %928 = vmatpush1.msra.mxu0 0.0
    %929 = vmatprep.subr.mxu0 0.0
    %930 = vmatpush1.msra.mxu0 0.0
    %931 = vmatprep.subr.mxu0 0.0
    %932 = vmatpush1.msra.mxu0 0.0
    %933 = vmatprep.subr.mxu0 0.0
    %934 = vmatpush1.msra.mxu0 0.0
    %935 = vmatprep.subr.mxu0 0.0
    %936 = vmatpush1.msra.mxu0 0.0
    %937 = vmatprep.subr.mxu0 0.0
    %938 = vmatpush1.msra.mxu0 0.0
    %939 = vmatprep.subr.mxu0 0.0
    %940 = vmatpush1.msra.mxu0 0.0
    %941 = vmatprep.subr.mxu0 0.0
    %942 = vmatpush1.msra.mxu0 0.0
    %943 = vmatprep.subr.mxu0 0.0
    %944 = vmatpush1.msra.mxu0 0.0
    %945 = vmatprep.subr.mxu0 0.0
    %946 = vmatpush1.msra.mxu0 0.0
    %947 = vmatprep.subr.mxu0 0.0
    %948 = vmatpush1.msra.mxu0 0.0
    %949 = vmatprep.subr.mxu0 0.0
    %950 = vmatpush1.msra.mxu0 0.0
    %951 = vmatprep.subr.mxu0 0.0
    %952 = vmatpush1.msra.mxu0 0.0
    %953 = vmatprep.subr.mxu0 0.0
    %954 = vmatpush1.msra.mxu0 0.0
    %955 = vmatprep.subr.mxu0 0.0
    %956 = vmatpush1.msra.mxu0 0.0
    %957 = vmatprep.mubr.f32.mxu0 0.0
    %958 = vmatmul.mubr.f32.gmra.mrb[0].mxu0 %v891
    %v959 = vpop.f32.mrb[0].mxu0
    %v960 = vadd.f32 0.0, %v959
    %v961 = vpop.f32.mrb[0].mxu0
    %962 = vdwg.mxu0
    %965 = vrot.lane.b32.xlu0 %v359, 120
    %v966 = vpop.permute.xlu0 %965
    %967 = vrot.lane.b32.xlu0 %v364, 120
    %v968 = vpop.permute.xlu0 %967
    %v972 = vsel %vm526, %v881, 0
    %974 = vmatprep.subr.mxu0 0.0
    %975 = vmatpush1.msra.mxu0 %v966
    %976 = vmatprep.subr.mxu0 0.0
    %977 = vmatpush1.msra.mxu0 %v968
    %978 = vmatprep.subr.mxu0 0.0
    %979 = vmatpush1.msra.mxu0 0.0
    %980 = vmatprep.subr.mxu0 0.0
    %981 = vmatpush1.msra.mxu0 0.0
    %982 = vmatprep.subr.mxu0 0.0
    %983 = vmatpush1.msra.mxu0 0.0
    %984 = vmatprep.subr.mxu0 0.0
    %985 = vmatpush1.msra.mxu0 0.0
    %986 = vmatprep.subr.mxu0 0.0
    %987 = vmatpush1.msra.mxu0 0.0
    %988 = vmatprep.subr.mxu0 0.0
    %989 = vmatpush1.msra.mxu0 0.0
    %990 = vmatprep.subr.mxu0 0.0
    %991 = vmatpush1.msra.mxu0 0.0
    %992 = vmatprep.subr.mxu0 0.0
    %993 = vmatpush1.msra.mxu0 0.0
    %994 = vmatprep.subr.mxu0 0.0
    %995 = vmatpush1.msra.mxu0 0.0
    %996 = vmatprep.subr.mxu0 0.0
    %997 = vmatpush1.msra.mxu0 0.0
    %998 = vmatprep.subr.mxu0 0.0
    %999 = vmatpush1.msra.mxu0 0.0
    %1000 = vmatprep.subr.mxu0 0.0
    %1001 = vmatpush1.msra.mxu0 0.0
    %1002 = vmatprep.subr.mxu0 0.0
    %1003 = vmatpush1.msra.mxu0 0.0
    %1004 = vmatprep.subr.mxu0 0.0
    %1005 = vmatpush1.msra.mxu0 0.0
    %1006 = vmatprep.subr.mxu0 0.0
    %1007 = vmatpush1.msra.mxu0 0.0
    %1008 = vmatprep.subr.mxu0 0.0
    %1009 = vmatpush1.msra.mxu0 0.0
    %1010 = vmatprep.subr.mxu0 0.0
    %1011 = vmatpush1.msra.mxu0 0.0
    %1012 = vmatprep.subr.mxu0 0.0
    %1013 = vmatpush1.msra.mxu0 0.0
    %1014 = vmatprep.subr.mxu0 0.0
    %1015 = vmatpush1.msra.mxu0 0.0
    %1016 = vmatprep.subr.mxu0 0.0
    %1017 = vmatpush1.msra.mxu0 0.0
    %1018 = vmatprep.subr.mxu0 0.0
    %1019 = vmatpush1.msra.mxu0 0.0
    %1020 = vmatprep.subr.mxu0 0.0
    %1021 = vmatpush1.msra.mxu0 0.0
    %1022 = vmatprep.subr.mxu0 0.0
    %1023 = vmatpush1.msra.mxu0 0.0
    %1024 = vmatprep.subr.mxu0 0.0
    %1025 = vmatpush1.msra.mxu0 0.0
    %1026 = vmatprep.subr.mxu0 0.0
    %1027 = vmatpush1.msra.mxu0 0.0
    %1028 = vmatprep.subr.mxu0 0.0
    %1029 = vmatpush1.msra.mxu0 0.0
    %1030 = vmatprep.subr.mxu0 0.0
    %1031 = vmatpush1.msra.mxu0 0.0
    %1032 = vmatprep.subr.mxu0 0.0
    %1033 = vmatpush1.msra.mxu0 0.0
    %1034 = vmatprep.subr.mxu0 0.0
    %1035 = vmatpush1.msra.mxu0 0.0
    %1036 = vmatprep.subr.mxu0 0.0
    %1037 = vmatpush1.msra.mxu0 0.0
    %1038 = vmatprep.mubr.f32.mxu0 0.0
    %1039 = vmatmul.mubr.f32.gmra.mrb[0].mxu0 %v972
    %v1040 = vpop.f32.mrb[0].mxu0
    %v1041 = vadd.f32 0.0, %v1040
    %v1042 = vpop.f32.mrb[0].mxu0
    %1043 = vdwg.mxu0
    %v1044 = vld [vmem:[%s9 + $0x8] sm:$0xff]
    %v1046 = vsel %vm367, %v960, 0
    %v1049 = vsel %vm367, %v1041, 0
    %1051 = vmatprep.subr.mxu0 0.0
    %1052 = vmatpush1.msra.mxu0 %v1044
    %1053 = vmatprep.subr.mxu0 0.0
    %1054 = vmatpush1.msra.mxu0 0.0
    %1055 = vmatprep.subr.mxu0 0.0
    %1056 = vmatpush1.msra.mxu0 0.0
    %1057 = vmatprep.subr.mxu0 0.0
    %1058 = vmatpush1.msra.mxu0 0.0
    %1059 = vmatprep.subr.mxu0 0.0
    %1060 = vmatpush1.msra.mxu0 0.0
    %1061 = vmatprep.subr.mxu0 0.0
    %1062 = vmatpush1.msra.mxu0 0.0
    %1063 = vmatprep.subr.mxu0 0.0
    %1064 = vmatpush1.msra.mxu0 0.0
    %1065 = vmatprep.subr.mxu0 0.0
    %1066 = vmatpush1.msra.mxu0 0.0
    %1067 = vmatprep.subr.mxu0 0.0
    %1068 = vmatpush1.msra.mxu0 0.0
    %1069 = vmatprep.subr.mxu0 0.0
    %1070 = vmatpush1.msra.mxu0 0.0
    %1071 = vmatprep.subr.mxu0 0.0
    %1072 = vmatpush1.msra.mxu0 0.0
    %1073 = vmatprep.subr.mxu0 0.0
    %1074 = vmatpush1.msra.mxu0 0.0
    %1075 = vmatprep.subr.mxu0 0.0
    %1076 = vmatpush1.msra.mxu0 0.0
    %1077 = vmatprep.subr.mxu0 0.0
    %1078 = vmatpush1.msra.mxu0 0.0
    %1079 = vmatprep.subr.mxu0 0.0
    %1080 = vmatpush1.msra.mxu0 0.0
    %1081 = vmatprep.subr.mxu0 0.0
    %1082 = vmatpush1.msra.mxu0 0.0
    %1083 = vmatprep.subr.mxu0 0.0
    %1084 = vmatpush1.msra.mxu0 0.0
    %1085 = vmatprep.subr.mxu0 0.0
    %1086 = vmatpush1.msra.mxu0 0.0
    %1087 = vmatprep.subr.mxu0 0.0
    %1088 = vmatpush1.msra.mxu0 0.0
    %1089 = vmatprep.subr.mxu0 0.0
    %1090 = vmatpush1.msra.mxu0 0.0
    %1091 = vmatprep.subr.mxu0 0.0
    %1092 = vmatpush1.msra.mxu0 0.0
    %1093 = vmatprep.subr.mxu0 0.0
    %1094 = vmatpush1.msra.mxu0 0.0
    %1095 = vmatprep.subr.mxu0 0.0
    %1096 = vmatpush1.msra.mxu0 0.0
    %1097 = vmatprep.subr.mxu0 0.0
    %1098 = vmatpush1.msra.mxu0 0.0
    %1099 = vmatprep.subr.mxu0 0.0
    %1100 = vmatpush1.msra.mxu0 0.0
    %1101 = vmatprep.subr.mxu0 0.0
    %1102 = vmatpush1.msra.mxu0 0.0
    %1103 = vmatprep.subr.mxu0 0.0
    %1104 = vmatpush1.msra.mxu0 0.0
    %1105 = vmatprep.subr.mxu0 0.0
    %1106 = vmatpush1.msra.mxu0 0.0
    %1107 = vmatprep.subr.mxu0 0.0
    %1108 = vmatpush1.msra.mxu0 0.0
    %1109 = vmatprep.subr.mxu0 0.0
    %1110 = vmatpush1.msra.mxu0 0.0
    %1111 = vmatprep.subr.mxu0 0.0
    %1112 = vmatpush1.msra.mxu0 0.0
    %1113 = vmatprep.subr.mxu0 0.0
    %1114 = vmatpush1.msra.mxu0 0.0
    %1115 = vmatprep.mubr.f32.mxu0 0.0
    %1116 = vmatmul.mubr.f32.gmra.mrb[0].mxu0 %v1046
    %v1117 = vpop.f32.mrb[0].mxu0
    %v1118 = vadd.f32 0.0, %v1117
    %v1119 = vpop.f32.mrb[0].mxu0
    %1120 = vmatprep.mubr.f32.mxu0 0.0
    %1121 = vmatmul.mubr.f32.gmra.mrb[0].mxu0 %v1049
    %v1122 = vpop.f32.mrb[0].mxu0
    %v1123 = vadd.f32 0.0, %v1122
    %v1124 = vpop.f32.mrb[0].mxu0
    %1125 = vdwg.mxu0
    %v1127 = vsel %vm367, %v619, 0
    %v1130 = vsel %vm367, %v692, 0
    %1132 = vmatprep.subr.mxu0 0.0
    %1133 = vmatpush1.msra.mxu0 %v695
    %1134 = vmatprep.subr.mxu0 0.0
    %1135 = vmatpush1.msra.mxu0 0.0
    %1136 = vmatprep.subr.mxu0 0.0
    %1137 = vmatpush1.msra.mxu0 0.0
    %1138 = vmatprep.subr.mxu0 0.0
    %1139 = vmatpush1.msra.mxu0 0.0
    %1140 = vmatprep.subr.mxu0 0.0
    %1141 = vmatpush1.msra.mxu0 0.0
    %1142 = vmatprep.subr.mxu0 0.0
    %1143 = vmatpush1.msra.mxu0 0.0
    %1144 = vmatprep.subr.mxu0 0.0
    %1145 = vmatpush1.msra.mxu0 0.0
    %1146 = vmatprep.subr.mxu0 0.0
    %1147 = vmatpush1.msra.mxu0 0.0
    %1148 = vmatprep.subr.mxu0 0.0
    %1149 = vmatpush1.msra.mxu0 0.0
    %1150 = vmatprep.subr.mxu0 0.0
    %1151 = vmatpush1.msra.mxu0 0.0
    %1152 = vmatprep.subr.mxu0 0.0
    %1153 = vmatpush1.msra.mxu0 0.0
    %1154 = vmatprep.subr.mxu0 0.0
    %1155 = vmatpush1.msra.mxu0 0.0
    %1156 = vmatprep.subr.mxu0 0.0
    %1157 = vmatpush1.msra.mxu0 0.0
    %1158 = vmatprep.subr.mxu0 0.0
    %1159 = vmatpush1.msra.mxu0 0.0
    %1160 = vmatprep.subr.mxu0 0.0
    %1161 = vmatpush1.msra.mxu0 0.0
    %1162 = vmatprep.subr.mxu0 0.0
    %1163 = vmatpush1.msra.mxu0 0.0
    %1164 = vmatprep.subr.mxu0 0.0
    %1165 = vmatpush1.msra.mxu0 0.0
    %1166 = vmatprep.subr.mxu0 0.0
    %1167 = vmatpush1.msra.mxu0 0.0
    %1168 = vmatprep.subr.mxu0 0.0
    %1169 = vmatpush1.msra.mxu0 0.0
    %1170 = vmatprep.subr.mxu0 0.0
    %1171 = vmatpush1.msra.mxu0 0.0
    %1172 = vmatprep.subr.mxu0 0.0
    %1173 = vmatpush1.msra.mxu0 0.0
    %1174 = vmatprep.subr.mxu0 0.0
    %1175 = vmatpush1.msra.mxu0 0.0
    %1176 = vmatprep.subr.mxu0 0.0
    %1177 = vmatpush1.msra.mxu0 0.0
    %1178 = vmatprep.subr.mxu0 0.0
    %1179 = vmatpush1.msra.mxu0 0.0
    %1180 = vmatprep.subr.mxu0 0.0
    %1181 = vmatpush1.msra.mxu0 0.0
    %1182 = vmatprep.subr.mxu0 0.0
    %1183 = vmatpush1.msra.mxu0 0.0
    %1184 = vmatprep.subr.mxu0 0.0
    %1185 = vmatpush1.msra.mxu0 0.0
    %1186 = vmatprep.subr.mxu0 0.0
    %1187 = vmatpush1.msra.mxu0 0.0
    %1188 = vmatprep.subr.mxu0 0.0
    %1189 = vmatpush1.msra.mxu0 0.0
    %1190 = vmatprep.subr.mxu0 0.0
    %1191 = vmatpush1.msra.mxu0 0.0
    %1192 = vmatprep.subr.mxu0 0.0
    %1193 = vmatpush1.msra.mxu0 0.0
    %1194 = vmatprep.subr.mxu0 0.0
    %1195 = vmatpush1.msra.mxu0 0.0
    %1196 = vmatprep.mubr.f32.mxu0 0.0
    %1197 = vmatmul.mubr.f32.gmra.mrb[0].mxu0 %v1127
    %v1198 = vpop.f32.mrb[0].mxu0
    %v1199 = vadd.f32 %v1118, %v1198
    %v1200 = vpop.f32.mrb[0].mxu0
    %1201 = vmatprep.mubr.f32.mxu0 0.0
    %1202 = vmatmul.mubr.f32.gmra.mrb[0].mxu0 %v1130
    %v1203 = vpop.f32.mrb[0].mxu0
    %v1204 = vadd.f32 %v1123, %v1203
    %v1205 = vpop.f32.mrb[0].mxu0
    %1206 = vdwg.mxu0
    %1207 = vrot.lane.b32.xlu0 %v126, 112
    %v1208 = vpop.permute.xlu0 %1207
    %1209 = vrot.lane.b32.xlu0 %v233, 112
    %v1210 = vpop.permute.xlu0 %1209
    %1211 = vrot.lane.b32.xlu0 %v238, 112
    %v1212 = vpop.permute.xlu0 %1211
    %v1213 = vsel %vm367, %v1208, 0
    %v1215 = vsel %vm367, %v1210, 0
    %v1217 = vsel %vm367, %v1212, 0
    %1219 = vmatprep.subr.mxu0 0.0
    %1220 = vmatpush1.xpose.msra.mxu0 %v1215
    %1221 = vmatprep.subr.mxu0 0.0
    %1222 = vmatpush1.xpose.msra.mxu0 %v1217
    %1223 = vmatprep.subr.mxu0 0.0
    %1224 = vmatpush1.xpose.msra.mxu0 0.0
    %1225 = vmatprep.subr.mxu0 0.0
    %1226 = vmatpush1.xpose.msra.mxu0 0.0
    %1227 = vmatprep.subr.mxu0 0.0
    %1228 = vmatpush1.xpose.msra.mxu0 0.0
    %1229 = vmatprep.subr.mxu0 0.0
    %1230 = vmatpush1.xpose.msra.mxu0 0.0
    %1231 = vmatprep.subr.mxu0 0.0
    %1232 = vmatpush1.xpose.msra.mxu0 0.0
    %1233 = vmatprep.subr.mxu0 0.0
    %1234 = vmatpush1.xpose.msra.mxu0 0.0
    %1235 = vmatprep.subr.mxu0 0.0
    %1236 = vmatpush1.xpose.msra.mxu0 0.0
    %1237 = vmatprep.subr.mxu0 0.0
    %1238 = vmatpush1.xpose.msra.mxu0 0.0
    %1239 = vmatprep.subr.mxu0 0.0
    %1240 = vmatpush1.xpose.msra.mxu0 0.0
    %1241 = vmatprep.subr.mxu0 0.0
    %1242 = vmatpush1.xpose.msra.mxu0 0.0
    %1243 = vmatprep.subr.mxu0 0.0
    %1244 = vmatpush1.xpose.msra.mxu0 0.0
    %1245 = vmatprep.subr.mxu0 0.0
    %1246 = vmatpush1.xpose.msra.mxu0 0.0
    %1247 = vmatprep.subr.mxu0 0.0
    %1248 = vmatpush1.xpose.msra.mxu0 0.0
    %1249 = vmatprep.subr.mxu0 0.0
    %1250 = vmatpush1.xpose.msra.mxu0 0.0
    %1251 = vmatprep.subr.mxu0 0.0
    %1252 = vmatpush1.xpose.msra.mxu0 0.0
    %1253 = vmatprep.subr.mxu0 0.0
    %1254 = vmatpush1.xpose.msra.mxu0 0.0
    %1255 = vmatprep.subr.mxu0 0.0
    %1256 = vmatpush1.xpose.msra.mxu0 0.0
    %1257 = vmatprep.subr.mxu0 0.0
    %1258 = vmatpush1.xpose.msra.mxu0 0.0
    %1259 = vmatprep.subr.mxu0 0.0
    %1260 = vmatpush1.xpose.msra.mxu0 0.0
    %1261 = vmatprep.subr.mxu0 0.0
    %1262 = vmatpush1.xpose.msra.mxu0 0.0
    %1263 = vmatprep.subr.mxu0 0.0
    %1264 = vmatpush1.xpose.msra.mxu0 0.0
    %1265 = vmatprep.subr.mxu0 0.0
    %1266 = vmatpush1.xpose.msra.mxu0 0.0
    %1267 = vmatprep.subr.mxu0 0.0
    %1268 = vmatpush1.xpose.msra.mxu0 0.0
    %1269 = vmatprep.subr.mxu0 0.0
    %1270 = vmatpush1.xpose.msra.mxu0 0.0
    %1271 = vmatprep.subr.mxu0 0.0
    %1272 = vmatpush1.xpose.msra.mxu0 0.0
    %1273 = vmatprep.subr.mxu0 0.0
    %1274 = vmatpush1.xpose.msra.mxu0 0.0
    %1275 = vmatprep.subr.mxu0 0.0
    %1276 = vmatpush1.xpose.msra.mxu0 0.0
    %1277 = vmatprep.subr.mxu0 0.0
    %1278 = vmatpush1.xpose.msra.mxu0 0.0
    %1279 = vmatprep.subr.mxu0 0.0
    %1280 = vmatpush1.xpose.msra.mxu0 0.0
    %1281 = vmatprep.subr.mxu0 0.0
    %1282 = vmatpush1.xpose.msra.mxu0 0.0
    %1283 = vmatprep.mubr.f32.mxu0 0.0
    %1284 = vmatmul.mubr.f32.gmra.mrb[0].mxu0 %v1213
    %v1285 = vpop.f32.mrb[0].mxu0
    %v1286 = vadd.f32 0.0, %v1285
    %v1287 = vpop.f32.mrb[0].mxu0
    %1288 = vdwg.mxu0
    %1289 = vrot.lane.b32.xlu0 %v131, 112
    %v1290 = vpop.permute.xlu0 %1289
    %1291 = vrot.lane.b32.xlu0 %v243, 112
    %v1292 = vpop.permute.xlu0 %1291
    %1293 = vrot.lane.b32.xlu0 %v248, 112
    %v1294 = vpop.permute.xlu0 %1293
    %v1295 = vsel %vm367, %v1290, 0
    %v1297 = vsel %vm367, %v1292, 0
    %v1299 = vsel %vm367, %v1294, 0
    %1301 = vmatprep.subr.mxu0 0.0
    %1302 = vmatpush1.xpose.msra.mxu0 %v1297
    %1303 = vmatprep.subr.mxu0 0.0
    %1304 = vmatpush1.xpose.msra.mxu0 %v1299
    %1305 = vmatprep.subr.mxu0 0.0
    %1306 = vmatpush1.xpose.msra.mxu0 0.0
    %1307 = vmatprep.subr.mxu0 0.0
    %1308 = vmatpush1.xpose.msra.mxu0 0.0
    %1309 = vmatprep.subr.mxu0 0.0
    %1310 = vmatpush1.xpose.msra.mxu0 0.0
    %1311 = vmatprep.subr.mxu0 0.0
    %1312 = vmatpush1.xpose.msra.mxu0 0.0
    %1313 = vmatprep.subr.mxu0 0.0
    %1314 = vmatpush1.xpose.msra.mxu0 0.0
    %1315 = vmatprep.subr.mxu0 0.0
    %1316 = vmatpush1.xpose.msra.mxu0 0.0
    %1317 = vmatprep.subr.mxu0 0.0
    %1318 = vmatpush1.xpose.msra.mxu0 0.0
    %1319 = vmatprep.subr.mxu0 0.0
    %1320 = vmatpush1.xpose.msra.mxu0 0.0
    %1321 = vmatprep.subr.mxu0 0.0
    %1322 = vmatpush1.xpose.msra.mxu0 0.0
    %1323 = vmatprep.subr.mxu0 0.0
    %1324 = vmatpush1.xpose.msra.mxu0 0.0
    %1325 = vmatprep.subr.mxu0 0.0
    %1326 = vmatpush1.xpose.msra.mxu0 0.0
    %1327 = vmatprep.subr.mxu0 0.0
    %1328 = vmatpush1.xpose.msra.mxu0 0.0
    %1329 = vmatprep.subr.mxu0 0.0
    %1330 = vmatpush1.xpose.msra.mxu0 0.0
    %1331 = vmatprep.subr.mxu0 0.0
    %1332 = vmatpush1.xpose.msra.mxu0 0.0
    %1333 = vmatprep.subr.mxu0 0.0
    %1334 = vmatpush1.xpose.msra.mxu0 0.0
    %1335 = vmatprep.subr.mxu0 0.0
    %1336 = vmatpush1.xpose.msra.mxu0 0.0
    %1337 = vmatprep.subr.mxu0 0.0
    %1338 = vmatpush1.xpose.msra.mxu0 0.0
    %1339 = vmatprep.subr.mxu0 0.0
    %1340 = vmatpush1.xpose.msra.mxu0 0.0
    %1341 = vmatprep.subr.mxu0 0.0
    %1342 = vmatpush1.xpose.msra.mxu0 0.0
    %1343 = vmatprep.subr.mxu0 0.0
    %1344 = vmatpush1.xpose.msra.mxu0 0.0
    %1345 = vmatprep.subr.mxu0 0.0
    %1346 = vmatpush1.xpose.msra.mxu0 0.0
    %1347 = vmatprep.subr.mxu0 0.0
    %1348 = vmatpush1.xpose.msra.mxu0 0.0
    %1349 = vmatprep.subr.mxu0 0.0
    %1350 = vmatpush1.xpose.msra.mxu0 0.0
    %1351 = vmatprep.subr.mxu0 0.0
    %1352 = vmatpush1.xpose.msra.mxu0 0.0
    %1353 = vmatprep.subr.mxu0 0.0
    %1354 = vmatpush1.xpose.msra.mxu0 0.0
    %1355 = vmatprep.subr.mxu0 0.0
    %1356 = vmatpush1.xpose.msra.mxu0 0.0
    %1357 = vmatprep.subr.mxu0 0.0
    %1358 = vmatpush1.xpose.msra.mxu0 0.0
    %1359 = vmatprep.subr.mxu0 0.0
    %1360 = vmatpush1.xpose.msra.mxu0 0.0
    %1361 = vmatprep.subr.mxu0 0.0
    %1362 = vmatpush1.xpose.msra.mxu0 0.0
    %1363 = vmatprep.subr.mxu0 0.0
    %1364 = vmatpush1.xpose.msra.mxu0 0.0
    %1365 = vmatprep.mubr.f32.mxu0 0.0
    %1366 = vmatmul.mubr.f32.gmra.mrb[0].mxu0 %v1295
    %v1367 = vpop.f32.mrb[0].mxu0
    %v1368 = vadd.f32 0.0, %v1367
    %v1369 = vpop.f32.mrb[0].mxu0
    %1370 = vdwg.mxu0
    %v1371 = vsel %vm526, %v1286, -inf
    %1372 = vmax.xlane.f32.xlu0 %v1371
    %v1373 = vpop.xlane.xlu0 %1372
    %v1374 = vsel %vm526, %v1368, -inf
    %1375 = vmax.xlane.f32.xlu0 %v1374
    %v1376 = vpop.xlane.xlu0 %1375
    %v1377 = vsub.f32 %v1286, %v1373
    %v1378 = vsub.f32 %v1368, %v1376
    %v1379 = vmul.f32 %v1377, 1.442695
    %v1380 = vpow.pop %v1379
    %v1381 = vmul.f32 %v1378, 1.442695
    %v1382 = vpow.pop %v1381
    %v1383 = vsel %vm526, %v1380, 0.0
    %1384 = vadd.xlane.f32.xlu0 %v1383
    %v1385 = vpop.xlane.xlu0 %1384
    %v1386 = vsel %vm526, %v1382, 0.0
    %1387 = vadd.xlane.f32.xlu0 %v1386
    %v1388 = vpop.xlane.xlu0 %1387
    %v1389 = vrcp.pop %v1385
    %v1390 = vmul.f32 %v1380, %v1389
    %v1391 = vrcp.pop %v1388
    %v1392 = vmul.f32 %v1382, %v1391
    %1393 = vrot.lane.b32.xlu0 %v349, 112
    %v1394 = vpop.permute.xlu0 %1393
    %1395 = vrot.lane.b32.xlu0 %v354, 112
    %v1396 = vpop.permute.xlu0 %1395
    %v1400 = vsel %vm526, %v1390, 0
    %1402 = vmatprep.subr.mxu0 0.0
    %1403 = vmatpush1.msra.mxu0 %v1394
    %1404 = vmatprep.subr.mxu0 0.0
    %1405 = vmatpush1.msra.mxu0 %v1396
    %1406 = vmatprep.subr.mxu0 0.0
    %1407 = vmatpush1.msra.mxu0 0.0
    %1408 = vmatprep.subr.mxu0 0.0
    %1409 = vmatpush1.msra.mxu0 0.0
    %1410 = vmatprep.subr.mxu0 0.0
    %1411 = vmatpush1.msra.mxu0 0.0
    %1412 = vmatprep.subr.mxu0 0.0
    %1413 = vmatpush1.msra.mxu0 0.0
    %1414 = vmatprep.subr.mxu0 0.0
    %1415 = vmatpush1.msra.mxu0 0.0
    %1416 = vmatprep.subr.mxu0 0.0
    %1417 = vmatpush1.msra.mxu0 0.0
    %1418 = vmatprep.subr.mxu0 0.0
    %1419 = vmatpush1.msra.mxu0 0.0
    %1420 = vmatprep.subr.mxu0 0.0
    %1421 = vmatpush1.msra.mxu0 0.0
    %1422 = vmatprep.subr.mxu0 0.0
    %1423 = vmatpush1.msra.mxu0 0.0
    %1424 = vmatprep.subr.mxu0 0.0
    %1425 = vmatpush1.msra.mxu0 0.0
    %1426 = vmatprep.subr.mxu0 0.0
    %1427 = vmatpush1.msra.mxu0 0.0
    %1428 = vmatprep.subr.mxu0 0.0
    %1429 = vmatpush1.msra.mxu0 0.0
    %1430 = vmatprep.subr.mxu0 0.0
    %1431 = vmatpush1.msra.mxu0 0.0
    %1432 = vmatprep.subr.mxu0 0.0
    %1433 = vmatpush1.msra.mxu0 0.0
    %1434 = vmatprep.subr.mxu0 0.0
    %1435 = vmatpush1.msra.mxu0 0.0
    %1436 = vmatprep.subr.mxu0 0.0
    %1437 = vmatpush1.msra.mxu0 0.0
    %1438 = vmatprep.subr.mxu0 0.0
    %1439 = vmatpush1.msra.mxu0 0.0
    %1440 = vmatprep.subr.mxu0 0.0
    %1441 = vmatpush1.msra.mxu0 0.0
    %1442 = vmatprep.subr.mxu0 0.0
    %1443 = vmatpush1.msra.mxu0 0.0
    %1444 = vmatprep.subr.mxu0 0.0
    %1445 = vmatpush1.msra.mxu0 0.0
    %1446 = vmatprep.subr.mxu0 0.0
    %1447 = vmatpush1.msra.mxu0 0.0
    %1448 = vmatprep.subr.mxu0 0.0
    %1449 = vmatpush1.msra.mxu0 0.0
    %1450 = vmatprep.subr.mxu0 0.0
    %1451 = vmatpush1.msra.mxu0 0.0
    %1452 = vmatprep.subr.mxu0 0.0
    %1453 = vmatpush1.msra.mxu0 0.0
    %1454 = vmatprep.subr.mxu0 0.0
    %1455 = vmatpush1.msra.mxu0 0.0
    %1456 = vmatprep.subr.mxu0 0.0
    %1457 = vmatpush1.msra.mxu0 0.0
    %1458 = vmatprep.subr.mxu0 0.0
    %1459 = vmatpush1.msra.mxu0 0.0
    %1460 = vmatprep.subr.mxu0 0.0
    %1461 = vmatpush1.msra.mxu0 0.0
    %1462 = vmatprep.subr.mxu0 0.0
    %1463 = vmatpush1.msra.mxu0 0.0
    %1464 = vmatprep.subr.mxu0 0.0
    %1465 = vmatpush1.msra.mxu0 0.0
    %1466 = vmatprep.mubr.f32.mxu0 0.0
    %1467 = vmatmul.mubr.f32.gmra.mrb[0].mxu0 %v1400
    %v1468 = vpop.f32.mrb[0].mxu0
    %v1469 = vadd.f32 0.0, %v1468
    %v1470 = vpop.f32.mrb[0].mxu0
    %1471 = vdwg.mxu0
    %1472 = vrot.lane.b32.xlu0 %v359, 112
    %v1473 = vpop.permute.xlu0 %1472
    %1474 = vrot.lane.b32.xlu0 %v364, 112
    %v1475 = vpop.permute.xlu0 %1474
    %v1479 = vsel %vm526, %v1392, 0
    %1481 = vmatprep.subr.mxu0 0.0
    %1482 = vmatpush1.msra.mxu0 %v1473
    %1483 = vmatprep.subr.mxu0 0.0
    %1484 = vmatpush1.msra.mxu0 %v1475
    %1485 = vmatprep.subr.mxu0 0.0
    %1486 = vmatpush1.msra.mxu0 0.0
    %1487 = vmatprep.subr.mxu0 0.0
    %1488 = vmatpush1.msra.mxu0 0.0
    %1489 = vmatprep.subr.mxu0 0.0
    %1490 = vmatpush1.msra.mxu0 0.0
    %1491 = vmatprep.subr.mxu0 0.0
    %1492 = vmatpush1.msra.mxu0 0.0
    %1493 = vmatprep.subr.mxu0 0.0
    %1494 = vmatpush1.msra.mxu0 0.0
    %1495 = vmatprep.subr.mxu0 0.0
    %1496 = vmatpush1.msra.mxu0 0.0
    %1497 = vmatprep.subr.mxu0 0.0
    %1498 = vmatpush1.msra.mxu0 0.0
    %1499 = vmatprep.subr.mxu0 0.0
    %1500 = vmatpush1.msra.mxu0 0.0
    %1501 = vmatprep.subr.mxu0 0.0
    %1502 = vmatpush1.msra.mxu0 0.0
    %1503 = vmatprep.subr.mxu0 0.0
    %1504 = vmatpush1.msra.mxu0 0.0
    %1505 = vmatprep.subr.mxu0 0.0
    %1506 = vmatpush1.msra.mxu0 0.0
    %1507 = vmatprep.subr.mxu0 0.0
    %1508 = vmatpush1.msra.mxu0 0.0
    %1509 = vmatprep.subr.mxu0 0.0
    %1510 = vmatpush1.msra.mxu0 0.0
    %1511 = vmatprep.subr.mxu0 0.0
    %1512 = vmatpush1.msra.mxu0 0.0
    %1513 = vmatprep.subr.mxu0 0.0
    %1514 = vmatpush1.msra.mxu0 0.0
    %1515 = vmatprep.subr.mxu0 0.0
    %1516 = vmatpush1.msra.mxu0 0.0
    %1517 = vmatprep.subr.mxu0 0.0
    %1518 = vmatpush1.msra.mxu0 0.0
    %1519 = vmatprep.subr.mxu0 0.0
    %1520 = vmatpush1.msra.mxu0 0.0
    %1521 = vmatprep.subr.mxu0 0.0
    %1522 = vmatpush1.msra.mxu0 0.0
    %1523 = vmatprep.subr.mxu0 0.0
    %1524 = vmatpush1.msra.mxu0 0.0
    %1525 = vmatprep.subr.mxu0 0.0
    %1526 = vmatpush1.msra.mxu0 0.0
    %1527 = vmatprep.subr.mxu0 0.0
    %1528 = vmatpush1.msra.mxu0 0.0
    %1529 = vmatprep.subr.mxu0 0.0
    %1530 = vmatpush1.msra.mxu0 0.0
    %1531 = vmatprep.subr.mxu0 0.0
    %1532 = vmatpush1.msra.mxu0 0.0
    %1533 = vmatprep.subr.mxu0 0.0
    %1534 = vmatpush1.msra.mxu0 0.0
    %1535 = vmatprep.subr.mxu0 0.0
    %1536 = vmatpush1.msra.mxu0 0.0
    %1537 = vmatprep.subr.mxu0 0.0
    %1538 = vmatpush1.msra.mxu0 0.0
    %1539 = vmatprep.subr.mxu0 0.0
    %1540 = vmatpush1.msra.mxu0 0.0
    %1541 = vmatprep.subr.mxu0 0.0
    %1542 = vmatpush1.msra.mxu0 0.0
    %1543 = vmatprep.subr.mxu0 0.0
    %1544 = vmatpush1.msra.mxu0 0.0
    %1545 = vmatprep.mubr.f32.mxu0 0.0
    %1546 = vmatmul.mubr.f32.gmra.mrb[0].mxu0 %v1479
    %v1547 = vpop.f32.mrb[0].mxu0
    %v1548 = vadd.f32 0.0, %v1547
    %v1549 = vpop.f32.mrb[0].mxu0
    %1550 = vdwg.mxu0
    %v1551 = vld [vmem:[%s9 + $0x10] sm:$0xff]
    %v1553 = vsel %vm367, %v1469, 0
    %v1556 = vsel %vm367, %v1548, 0
    %1558 = vmatprep.subr.mxu0 0.0
    %1559 = vmatpush1.msra.mxu0 %v1551
    %1560 = vmatprep.subr.mxu0 0.0
    %1561 = vmatpush1.msra.mxu0 0.0
    %1562 = vmatprep.subr.mxu0 0.0
    %1563 = vmatpush1.msra.mxu0 0.0
    %1564 = vmatprep.subr.mxu0 0.0
    %1565 = vmatpush1.msra.mxu0 0.0
    %1566 = vmatprep.subr.mxu0 0.0
    %1567 = vmatpush1.msra.mxu0 0.0
    %1568 = vmatprep.subr.mxu0 0.0
    %1569 = vmatpush1.msra.mxu0 0.0
    %1570 = vmatprep.subr.mxu0 0.0
    %1571 = vmatpush1.msra.mxu0 0.0
    %1572 = vmatprep.subr.mxu0 0.0
    %1573 = vmatpush1.msra.mxu0 0.0
    %1574 = vmatprep.subr.mxu0 0.0
    %1575 = vmatpush1.msra.mxu0 0.0
    %1576 = vmatprep.subr.mxu0 0.0
    %1577 = vmatpush1.msra.mxu0 0.0
    %1578 = vmatprep.subr.mxu0 0.0
    %1579 = vmatpush1.msra.mxu0 0.0
    %1580 = vmatprep.subr.mxu0 0.0
    %1581 = vmatpush1.msra.mxu0 0.0
    %1582 = vmatprep.subr.mxu0 0.0
    %1583 = vmatpush1.msra.mxu0 0.0
    %1584 = vmatprep.subr.mxu0 0.0
    %1585 = vmatpush1.msra.mxu0 0.0
    %1586 = vmatprep.subr.mxu0 0.0
    %1587 = vmatpush1.msra.mxu0 0.0
    %1588 = vmatprep.subr.mxu0 0.0
    %1589 = vmatpush1.msra.mxu0 0.0
    %1590 = vmatprep.subr.mxu0 0.0
    %1591 = vmatpush1.msra.mxu0 0.0
    %1592 = vmatprep.subr.mxu0 0.0
    %1593 = vmatpush1.msra.mxu0 0.0
    %1594 = vmatprep.subr.mxu0 0.0
    %1595 = vmatpush1.msra.mxu0 0.0
    %1596 = vmatprep.subr.mxu0 0.0
    %1597 = vmatpush1.msra.mxu0 0.0
    %1598 = vmatprep.subr.mxu0 0.0
    %1599 = vmatpush1.msra.mxu0 0.0
    %1600 = vmatprep.subr.mxu0 0.0
    %1601 = vmatpush1.msra.mxu0 0.0
    %1602 = vmatprep.subr.mxu0 0.0
    %1603 = vmatpush1.msra.mxu0 0.0
    %1604 = vmatprep.subr.mxu0 0.0
    %1605 = vmatpush1.msra.mxu0 0.0
    %1606 = vmatprep.subr.mxu0 0.0
    %1607 = vmatpush1.msra.mxu0 0.0
    %1608 = vmatprep.subr.mxu0 0.0
    %1609 = vmatpush1.msra.mxu0 0.0
    %1610 = vmatprep.subr.mxu0 0.0
    %1611 = vmatpush1.msra.mxu0 0.0
    %1612 = vmatprep.subr.mxu0 0.0
    %1613 = vmatpush1.msra.mxu0 0.0
    %1614 = vmatprep.subr.mxu0 0.0
    %1615 = vmatpush1.msra.mxu0 0.0
    %1616 = vmatprep.subr.mxu0 0.0
    %1617 = vmatpush1.msra.mxu0 0.0
    %1618 = vmatprep.subr.mxu0 0.0
    %1619 = vmatpush1.msra.mxu0 0.0
    %1620 = vmatprep.subr.mxu0 0.0
    %1621 = vmatpush1.msra.mxu0 0.0
    %1622 = vmatprep.mubr.f32.mxu0 0.0
    %1623 = vmatmul.mubr.f32.gmra.mrb[0].mxu0 %v1553
    %v1624 = vpop.f32.mrb[0].mxu0
    %v1625 = vadd.f32 0.0, %v1624
    %v1626 = vpop.f32.mrb[0].mxu0
    %1627 = vmatprep.mubr.f32.mxu0 0.0
    %1628 = vmatmul.mubr.f32.gmra.mrb[0].mxu0 %v1556
    %v1629 = vpop.f32.mrb[0].mxu0
    %v1630 = vadd.f32 0.0, %v1629
    %v1631 = vpop.f32.mrb[0].mxu0
    %1632 = vdwg.mxu0
    %v1633 = vadd.f32 %v1199, %v1625
    %v1634 = vadd.f32 %v1204, %v1630
    %1635 = vrot.lane.b32.xlu0 %v126, 104
    %v1636 = vpop.permute.xlu0 %1635
    %1637 = vrot.lane.b32.xlu0 %v233, 104
    %v1638 = vpop.permute.xlu0 %1637
    %1639 = vrot.lane.b32.xlu0 %v238, 104
    %v1640 = vpop.permute.xlu0 %1639
    %v1641 = vsel %vm367, %v1636, 0
    %v1643 = vsel %vm367, %v1638, 0
    %v1645 = vsel %vm367, %v1640, 0
    %1647 = vmatprep.subr.mxu0 0.0
    %1648 = vmatpush1.xpose.msra.mxu0 %v1643
    %1649 = vmatprep.subr.mxu0 0.0
    %1650 = vmatpush1.xpose.msra.mxu0 %v1645
    %1651 = vmatprep.subr.mxu0 0.0
    %1652 = vmatpush1.xpose.msra.mxu0 0.0
    %1653 = vmatprep.subr.mxu0 0.0
    %1654 = vmatpush1.xpose.msra.mxu0 0.0
    %1655 = vmatprep.subr.mxu0 0.0
    %1656 = vmatpush1.xpose.msra.mxu0 0.0
    %1657 = vmatprep.subr.mxu0 0.0
    %1658 = vmatpush1.xpose.msra.mxu0 0.0
    %1659 = vmatprep.subr.mxu0 0.0
    %1660 = vmatpush1.xpose.msra.mxu0 0.0
    %1661 = vmatprep.subr.mxu0 0.0
    %1662 = vmatpush1.xpose.msra.mxu0 0.0
    %1663 = vmatprep.subr.mxu0 0.0
    %1664 = vmatpush1.xpose.msra.mxu0 0.0
    %1665 = vmatprep.subr.mxu0 0.0
    %1666 = vmatpush1.xpose.msra.mxu0 0.0
    %1667 = vmatprep.subr.mxu0 0.0
    %1668 = vmatpush1.xpose.msra.mxu0 0.0
    %1669 = vmatprep.subr.mxu0 0.0
    %1670 = vmatpush1.xpose.msra.mxu0 0.0
    %1671 = vmatprep.subr.mxu0 0.0
    %1672 = vmatpush1.xpose.msra.mxu0 0.0
    %1673 = vmatprep.subr.mxu0 0.0
    %1674 = vmatpush1.xpose.msra.mxu0 0.0
    %1675 = vmatprep.subr.mxu0 0.0
    %1676 = vmatpush1.xpose.msra.mxu0 0.0
    %1677 = vmatprep.subr.mxu0 0.0
    %1678 = vmatpush1.xpose.msra.mxu0 0.0
    %1679 = vmatprep.subr.mxu0 0.0
    %1680 = vmatpush1.xpose.msra.mxu0 0.0
    %1681 = vmatprep.subr.mxu0 0.0
    %1682 = vmatpush1.xpose.msra.mxu0 0.0
    %1683 = vmatprep.subr.mxu0 0.0
    %1684 = vmatpush1.xpose.msra.mxu0 0.0
    %1685 = vmatprep.subr.mxu0 0.0
    %1686 = vmatpush1.xpose.msra.mxu0 0.0
    %1687 = vmatprep.subr.mxu0 0.0
    %1688 = vmatpush1.xpose.msra.mxu0 0.0
    %1689 = vmatprep.subr.mxu0 0.0
    %1690 = vmatpush1.xpose.msra.mxu0 0.0
    %1691 = vmatprep.subr.mxu0 0.0
    %1692 = vmatpush1.xpose.msra.mxu0 0.0
    %1693 = vmatprep.subr.mxu0 0.0
    %1694 = vmatpush1.xpose.msra.mxu0 0.0
    %1695 = vmatprep.subr.mxu0 0.0
    %1696 = vmatpush1.xpose.msra.mxu0 0.0
    %1697 = vmatprep.subr.mxu0 0.0
    %1698 = vmatpush1.xpose.msra.mxu0 0.0
    %1699 = vmatprep.subr.mxu0 0.0
    %1700 = vmatpush1.xpose.msra.mxu0 0.0
    %1701 = vmatprep.subr.mxu0 0.0
    %1702 = vmatpush1.xpose.msra.mxu0 0.0
    %1703 = vmatprep.subr.mxu0 0.0
    %1704 = vmatpush1.xpose.msra.mxu0 0.0
    %1705 = vmatprep.subr.mxu0 0.0
    %1706 = vmatpush1.xpose.msra.mxu0 0.0
    %1707 = vmatprep.subr.mxu0 0.0
    %1708 = vmatpush1.xpose.msra.mxu0 0.0
    %1709 = vmatprep.subr.mxu0 0.0
    %1710 = vmatpush1.xpose.msra.mxu0 0.0
    %1711 = vmatprep.mubr.f32.mxu0 0.0
    %1712 = vmatmul.mubr.f32.gmra.mrb[0].mxu0 %v1641
    %v1713 = vpop.f32.mrb[0].mxu0
    %v1714 = vadd.f32 0.0, %v1713
    %v1715 = vpop.f32.mrb[0].mxu0
    %1716 = vdwg.mxu0
    %1717 = vrot.lane.b32.xlu0 %v131, 104
    %v1718 = vpop.permute.xlu0 %1717
    %1719 = vrot.lane.b32.xlu0 %v243, 104
    %v1720 = vpop.permute.xlu0 %1719
    %1721 = vrot.lane.b32.xlu0 %v248, 104
    %v1722 = vpop.permute.xlu0 %1721
    %v1723 = vsel %vm367, %v1718, 0
    %v1725 = vsel %vm367, %v1720, 0
    %v1727 = vsel %vm367, %v1722, 0
    %1729 = vmatprep.subr.mxu0 0.0
    %1730 = vmatpush1.xpose.msra.mxu0 %v1725
    %1731 = vmatprep.subr.mxu0 0.0
    %1732 = vmatpush1.xpose.msra.mxu0 %v1727
    %1733 = vmatprep.subr.mxu0 0.0
    %1734 = vmatpush1.xpose.msra.mxu0 0.0
    %1735 = vmatprep.subr.mxu0 0.0
    %1736 = vmatpush1.xpose.msra.mxu0 0.0
    %1737 = vmatprep.subr.mxu0 0.0
    %1738 = vmatpush1.xpose.msra.mxu0 0.0
    %1739 = vmatprep.subr.mxu0 0.0
    %1740 = vmatpush1.xpose.msra.mxu0 0.0
    %1741 = vmatprep.subr.mxu0 0.0
    %1742 = vmatpush1.xpose.msra.mxu0 0.0
    %1743 = vmatprep.subr.mxu0 0.0
    %1744 = vmatpush1.xpose.msra.mxu0 0.0
    %1745 = vmatprep.subr.mxu0 0.0
    %1746 = vmatpush1.xpose.msra.mxu0 0.0
    %1747 = vmatprep.subr.mxu0 0.0
    %1748 = vmatpush1.xpose.msra.mxu0 0.0
    %1749 = vmatprep.subr.mxu0 0.0
    %1750 = vmatpush1.xpose.msra.mxu0 0.0
    %1751 = vmatprep.subr.mxu0 0.0
    %1752 = vmatpush1.xpose.msra.mxu0 0.0
    %1753 = vmatprep.subr.mxu0 0.0
    %1754 = vmatpush1.xpose.msra.mxu0 0.0
    %1755 = vmatprep.subr.mxu0 0.0
    %1756 = vmatpush1.xpose.msra.mxu0 0.0
    %1757 = vmatprep.subr.mxu0 0.0
    %1758 = vmatpush1.xpose.msra.mxu0 0.0
    %1759 = vmatprep.subr.mxu0 0.0
    %1760 = vmatpush1.xpose.msra.mxu0 0.0
    %1761 = vmatprep.subr.mxu0 0.0
    %1762 = vmatpush1.xpose.msra.mxu0 0.0
    %1763 = vmatprep.subr.mxu0 0.0
    %1764 = vmatpush1.xpose.msra.mxu0 0.0
    %1765 = vmatprep.subr.mxu0 0.0
    %1766 = vmatpush1.xpose.msra.mxu0 0.0
    %1767 = vmatprep.subr.mxu0 0.0
    %1768 = vmatpush1.xpose.msra.mxu0 0.0
    %1769 = vmatprep.subr.mxu0 0.0
    %1770 = vmatpush1.xpose.msra.mxu0 0.0
    %1771 = vmatprep.subr.mxu0 0.0
    %1772 = vmatpush1.xpose.msra.mxu0 0.0
    %1773 = vmatprep.subr.mxu0 0.0
    %1774 = vmatpush1.xpose.msra.mxu0 0.0
    %1775 = vmatprep.subr.mxu0 0.0
    %1776 = vmatpush1.xpose.msra.mxu0 0.0
    %1777 = vmatprep.subr.mxu0 0.0
    %1778 = vmatpush1.xpose.msra.mxu0 0.0
    %1779 = vmatprep.subr.mxu0 0.0
    %1780 = vmatpush1.xpose.msra.mxu0 0.0
    %1781 = vmatprep.subr.mxu0 0.0
    %1782 = vmatpush1.xpose.msra.mxu0 0.0
    %1783 = vmatprep.subr.mxu0 0.0
    %1784 = vmatpush1.xpose.msra.mxu0 0.0
    %1785 = vmatprep.subr.mxu0 0.0
    %1786 = vmatpush1.xpose.msra.mxu0 0.0
    %1787 = vmatprep.subr.mxu0 0.0
    %1788 = vmatpush1.xpose.msra.mxu0 0.0
    %1789 = vmatprep.subr.mxu0 0.0
    %1790 = vmatpush1.xpose.msra.mxu0 0.0
    %1791 = vmatprep.subr.mxu0 0.0
    %1792 = vmatpush1.xpose.msra.mxu0 0.0
    %1793 = vmatprep.mubr.f32.mxu0 0.0
    %1794 = vmatmul.mubr.f32.gmra.mrb[0].mxu0 %v1723
    %v1795 = vpop.f32.mrb[0].mxu0
    %v1796 = vadd.f32 0.0, %v1795
    %v1797 = vpop.f32.mrb[0].mxu0
    %1798 = vdwg.mxu0
    %v1799 = vsel %vm526, %v1714, -inf
    %1800 = vmax.xlane.f32.xlu0 %v1799
    %v1801 = vpop.xlane.xlu0 %1800
    %v1802 = vsel %vm526, %v1796, -inf
    %1803 = vmax.xlane.f32.xlu0 %v1802
    %v1804 = vpop.xlane.xlu0 %1803
    %v1805 = vsub.f32 %v1714, %v1801
    %v1806 = vsub.f32 %v1796, %v1804
    %v1807 = vmul.f32 %v1805, 1.442695
    %v1808 = vpow.pop %v1807
    %v1809 = vmul.f32 %v1806, 1.442695
    %v1810 = vpow.pop %v1809
    %v1811 = vsel %vm526, %v1808, 0.0
    %1812 = vadd.xlane.f32.xlu0 %v1811
    %v1813 = vpop.xlane.xlu0 %1812
    %v1814 = vsel %vm526, %v1810, 0.0
    %1815 = vadd.xlane.f32.xlu0 %v1814
    %v1816 = vpop.xlane.xlu0 %1815
    %v1817 = vrcp.pop %v1813
    %v1818 = vmul.f32 %v1808, %v1817
    %v1819 = vrcp.pop %v1816
    %v1820 = vmul.f32 %v1810, %v1819
    %1821 = vrot.lane.b32.xlu0 %v349, 104
    %v1822 = vpop.permute.xlu0 %1821
    %1823 = vrot.lane.b32.xlu0 %v354, 104
    %v1824 = vpop.permute.xlu0 %1823
    %v1828 = vsel %vm526, %v1818, 0
    %1830 = vmatprep.subr.mxu0 0.0
    %1831 = vmatpush1.msra.mxu0 %v1822
    %1832 = vmatprep.subr.mxu0 0.0
    %1833 = vmatpush1.msra.mxu0 %v1824
    %1834 = vmatprep.subr.mxu0 0.0
    %1835 = vmatpush1.msra.mxu0 0.0
    %1836 = vmatprep.subr.mxu0 0.0
    %1837 = vmatpush1.msra.mxu0 0.0
    %1838 = vmatprep.subr.mxu0 0.0
    %1839 = vmatpush1.msra.mxu0 0.0
    %1840 = vmatprep.subr.mxu0 0.0
    %1841 = vmatpush1.msra.mxu0 0.0
    %1842 = vmatprep.subr.mxu0 0.0
    %1843 = vmatpush1.msra.mxu0 0.0
    %1844 = vmatprep.subr.mxu0 0.0
    %1845 = vmatpush1.msra.mxu0 0.0
    %1846 = vmatprep.subr.mxu0 0.0
    %1847 = vmatpush1.msra.mxu0 0.0
    %1848 = vmatprep.subr.mxu0 0.0
    %1849 = vmatpush1.msra.mxu0 0.0
    %1850 = vmatprep.subr.mxu0 0.0
    %1851 = vmatpush1.msra.mxu0 0.0
    %1852 = vmatprep.subr.mxu0 0.0
    %1853 = vmatpush1.msra.mxu0 0.0
    %1854 = vmatprep.subr.mxu0 0.0
    %1855 = vmatpush1.msra.mxu0 0.0
    %1856 = vmatprep.subr.mxu0 0.0
    %1857 = vmatpush1.msra.mxu0 0.0
    %1858 = vmatprep.subr.mxu0 0.0
    %1859 = vmatpush1.msra.mxu0 0.0
    %1860 = vmatprep.subr.mxu0 0.0
    %1861 = vmatpush1.msra.mxu0 0.0
    %1862 = vmatprep.subr.mxu0 0.0
    %1863 = vmatpush1.msra.mxu0 0.0
    %1864 = vmatprep.subr.mxu0 0.0
    %1865 = vmatpush1.msra.mxu0 0.0
    %1866 = vmatprep.subr.mxu0 0.0
    %1867 = vmatpush1.msra.mxu0 0.0
    %1868 = vmatprep.subr.mxu0 0.0
    %1869 = vmatpush1.msra.mxu0 0.0
    %1870 = vmatprep.subr.mxu0 0.0
    %1871 = vmatpush1.msra.mxu0 0.0
    %1872 = vmatprep.subr.mxu0 0.0
    %1873 = vmatpush1.msra.mxu0 0.0
    %1874 = vmatprep.subr.mxu0 0.0
    %1875 = vmatpush1.msra.mxu0 0.0
    %1876 = vmatprep.subr.mxu0 0.0
    %1877 = vmatpush1.msra.mxu0 0.0
    %1878 = vmatprep.subr.mxu0 0.0
    %1879 = vmatpush1.msra.mxu0 0.0
    %1880 = vmatprep.subr.mxu0 0.0
    %1881 = vmatpush1.msra.mxu0 0.0
    %1882 = vmatprep.subr.mxu0 0.0
    %1883 = vmatpush1.msra.mxu0 0.0
    %1884 = vmatprep.subr.mxu0 0.0
    %1885 = vmatpush1.msra.mxu0 0.0
    %1886 = vmatprep.subr.mxu0 0.0
    %1887 = vmatpush1.msra.mxu0 0.0
    %1888 = vmatprep.subr.mxu0 0.0
    %1889 = vmatpush1.msra.mxu0 0.0
    %1890 = vmatprep.subr.mxu0 0.0
    %1891 = vmatpush1.msra.mxu0 0.0
    %1892 = vmatprep.subr.mxu0 0.0
    %1893 = vmatpush1.msra.mxu0 0.0
    %1894 = vmatprep.mubr.f32.mxu0 0.0
    %1895 = vmatmul.mubr.f32.gmra.mrb[0].mxu0 %v1828
    %v1896 = vpop.f32.mrb[0].mxu0
    %v1897 = vadd.f32 0.0, %v1896
    %v1898 = vpop.f32.mrb[0].mxu0
    %1899 = vdwg.mxu0
    %1900 = vrot.lane.b32.xlu0 %v359, 104
    %v1901 = vpop.permute.xlu0 %1900
    %1902 = vrot.lane.b32.xlu0 %v364, 104
    %v1903 = vpop.permute.xlu0 %1902
    %v1907 = vsel %vm526, %v1820, 0
    %1909 = vmatprep.subr.mxu0 0.0
    %1910 = vmatpush1.msra.mxu0 %v1901
    %1911 = vmatprep.subr.mxu0 0.0
    %1912 = vmatpush1.msra.mxu0 %v1903
    %1913 = vmatprep.subr.mxu0 0.0
    %1914 = vmatpush1.msra.mxu0 0.0
    %1915 = vmatprep.subr.mxu0 0.0
    %1916 = vmatpush1.msra.mxu0 0.0
    %1917 = vmatprep.subr.mxu0 0.0
    %1918 = vmatpush1.msra.mxu0 0.0
    %1919 = vmatprep.subr.mxu0 0.0
    %1920 = vmatpush1.msra.mxu0 0.0
    %1921 = vmatprep.subr.mxu0 0.0
    %1922 = vmatpush1.msra.mxu0 0.0
    %1923 = vmatprep.subr.mxu0 0.0
    %1924 = vmatpush1.msra.mxu0 0.0
    %1925 = vmatprep.subr.mxu0 0.0
    %1926 = vmatpush1.msra.mxu0 0.0
    %1927 = vmatprep.subr.mxu0 0.0
    %1928 = vmatpush1.msra.mxu0 0.0
    %1929 = vmatprep.subr.mxu0 0.0
    %1930 = vmatpush1.msra.mxu0 0.0
    %1931 = vmatprep.subr.mxu0 0.0
    %1932 = vmatpush1.msra.mxu0 0.0
    %1933 = vmatprep.subr.mxu0 0.0
    %1934 = vmatpush1.msra.mxu0 0.0
    %1935 = vmatprep.subr.mxu0 0.0
    %1936 = vmatpush1.msra.mxu0 0.0
    %1937 = vmatprep.subr.mxu0 0.0
    %1938 = vmatpush1.msra.mxu0 0.0
    %1939 = vmatprep.subr.mxu0 0.0
    %1940 = vmatpush1.msra.mxu0 0.0
    %1941 = vmatprep.subr.mxu0 0.0
    %1942 = vmatpush1.msra.mxu0 0.0
    %1943 = vmatprep.subr.mxu0 0.0
    %1944 = vmatpush1.msra.mxu0 0.0
    %1945 = vmatprep.subr.mxu0 0.0
    %1946 = vmatpush1.msra.mxu0 0.0
    %1947 = vmatprep.subr.mxu0 0.0
    %1948 = vmatpush1.msra.mxu0 0.0
    %1949 = vmatprep.subr.mxu0 0.0
    %1950 = vmatpush1.msra.mxu0 0.0
    %1951 = vmatprep.subr.mxu0 0.0
    %1952 = vmatpush1.msra.mxu0 0.0
    %1953 = vmatprep.subr.mxu0 0.0
    %1954 = vmatpush1.msra.mxu0 0.0
    %1955 = vmatprep.subr.mxu0 0.0
    %1956 = vmatpush1.msra.mxu0 0.0
    %1957 = vmatprep.subr.mxu0 0.0
    %1958 = vmatpush1.msra.mxu0 0.0
    %1959 = vmatprep.subr.mxu0 0.0
    %1960 = vmatpush1.msra.mxu0 0.0
    %1961 = vmatprep.subr.mxu0 0.0
    %1962 = vmatpush1.msra.mxu0 0.0
    %1963 = vmatprep.subr.mxu0 0.0
    %1964 = vmatpush1.msra.mxu0 0.0
    %1965 = vmatprep.subr.mxu0 0.0
    %1966 = vmatpush1.msra.mxu0 0.0
    %1967 = vmatprep.subr.mxu0 0.0
    %1968 = vmatpush1.msra.mxu0 0.0
    %1969 = vmatprep.subr.mxu0 0.0
    %1970 = vmatpush1.msra.mxu0 0.0
    %1971 = vmatprep.subr.mxu0 0.0
    %1972 = vmatpush1.msra.mxu0 0.0
    %1973 = vmatprep.mubr.f32.mxu0 0.0
    %1974 = vmatmul.mubr.f32.gmra.mrb[0].mxu0 %v1907
    %v1975 = vpop.f32.mrb[0].mxu0
    %v1976 = vadd.f32 0.0, %v1975
    %v1977 = vpop.f32.mrb[0].mxu0
    %1978 = vdwg.mxu0
    %v1979 = vld [vmem:[%s9 + $0x18] sm:$0xff]
    %v1981 = vsel %vm367, %v1897, 0
    %v1984 = vsel %vm367, %v1976, 0
    %1986 = vmatprep.subr.mxu0 0.0
    %1987 = vmatpush1.msra.mxu0 %v1979
    %1988 = vmatprep.subr.mxu0 0.0
    %1989 = vmatpush1.msra.mxu0 0.0
    %1990 = vmatprep.subr.mxu0 0.0
    %1991 = vmatpush1.msra.mxu0 0.0
    %1992 = vmatprep.subr.mxu0 0.0
    %1993 = vmatpush1.msra.mxu0 0.0
    %1994 = vmatprep.subr.mxu0 0.0
    %1995 = vmatpush1.msra.mxu0 0.0
    %1996 = vmatprep.subr.mxu0 0.0
    %1997 = vmatpush1.msra.mxu0 0.0
    %1998 = vmatprep.subr.mxu0 0.0
    %1999 = vmatpush1.msra.mxu0 0.0
    %2000 = vmatprep.subr.mxu0 0.0
    %2001 = vmatpush1.msra.mxu0 0.0
    %2002 = vmatprep.subr.mxu0 0.0
    %2003 = vmatpush1.msra.mxu0 0.0
    %2004 = vmatprep.subr.mxu0 0.0
    %2005 = vmatpush1.msra.mxu0 0.0
    %2006 = vmatprep.subr.mxu0 0.0
    %2007 = vmatpush1.msra.mxu0 0.0
    %2008 = vmatprep.subr.mxu0 0.0
    %2009 = vmatpush1.msra.mxu0 0.0
    %2010 = vmatprep.subr.mxu0 0.0
    %2011 = vmatpush1.msra.mxu0 0.0
    %2012 = vmatprep.subr.mxu0 0.0
    %2013 = vmatpush1.msra.mxu0 0.0
    %2014 = vmatprep.subr.mxu0 0.0
    %2015 = vmatpush1.msra.mxu0 0.0
    %2016 = vmatprep.subr.mxu0 0.0
    %2017 = vmatpush1.msra.mxu0 0.0
    %2018 = vmatprep.subr.mxu0 0.0
    %2019 = vmatpush1.msra.mxu0 0.0
    %2020 = vmatprep.subr.mxu0 0.0
    %2021 = vmatpush1.msra.mxu0 0.0
    %2022 = vmatprep.subr.mxu0 0.0
    %2023 = vmatpush1.msra.mxu0 0.0
    %2024 = vmatprep.subr.mxu0 0.0
    %2025 = vmatpush1.msra.mxu0 0.0
    %2026 = vmatprep.subr.mxu0 0.0
    %2027 = vmatpush1.msra.mxu0 0.0
    %2028 = vmatprep.subr.mxu0 0.0
    %2029 = vmatpush1.msra.mxu0 0.0
    %2030 = vmatprep.subr.mxu0 0.0
    %2031 = vmatpush1.msra.mxu0 0.0
    %2032 = vmatprep.subr.mxu0 0.0
    %2033 = vmatpush1.msra.mxu0 0.0
    %2034 = vmatprep.subr.mxu0 0.0
    %2035 = vmatpush1.msra.mxu0 0.0
    %2036 = vmatprep.subr.mxu0 0.0
    %2037 = vmatpush1.msra.mxu0 0.0
    %2038 = vmatprep.subr.mxu0 0.0
    %2039 = vmatpush1.msra.mxu0 0.0
    %2040 = vmatprep.subr.mxu0 0.0
    %2041 = vmatpush1.msra.mxu0 0.0
    %2042 = vmatprep.subr.mxu0 0.0
    %2043 = vmatpush1.msra.mxu0 0.0
    %2044 = vmatprep.subr.mxu0 0.0
    %2045 = vmatpush1.msra.mxu0 0.0
    %2046 = vmatprep.subr.mxu0 0.0
    %2047 = vmatpush1.msra.mxu0 0.0
    %2048 = vmatprep.subr.mxu0 0.0
    %2049 = vmatpush1.msra.mxu0 0.0
    %2050 = vmatprep.mubr.f32.mxu0 0.0
    %2051 = vmatmul.mubr.f32.gmra.mrb[0].mxu0 %v1981
    %v2052 = vpop.f32.mrb[0].mxu0
    %v2053 = vadd.f32 0.0, %v2052
    %v2054 = vpop.f32.mrb[0].mxu0
    %2055 = vmatprep.mubr.f32.mxu0 0.0
    %2056 = vmatmul.mubr.f32.gmra.mrb[0].mxu0 %v1984
    %v2057 = vpop.f32.mrb[0].mxu0
    %v2058 = vadd.f32 0.0, %v2057
    %v2059 = vpop.f32.mrb[0].mxu0
    %2060 = vdwg.mxu0
    %v2061 = vadd.f32 %v1633, %v2053
    %v2062 = vadd.f32 %v1634, %v2058
    %v2063 = vld [vmem:[%s10] sm:$0x1]
    %v2065 = vlaneseq
    %v2066 = vshrl.u32 %v2065, 7
    %v2067 = vsub.s32 0, %v2066
    %v2068 = vrot.slane %v2063, %v2067
    %v2070 = vadd.f32 %v2061, %v2068
    %v2071 = vadd.f32 %v2062, %v2068
    %2072 = vst [vmem:[#allocation2] sm:$0xff] %v2070
    %2073 = vst [vmem:[#allocation2 + $0x8] sm:$0xff] %v2071
    // Predicated region
    $region46: #{tpu_custom_call.1} parent=1 // pred_check
      _
    $region47: #{tpu_custom_call.1} parent=1 // pred_check_branch
      %2075 = sbr.rel (0) target = $region49
    $region48: #{tpu_custom_call.1} parent=1 // pred_region
      %s2077 = ssub.s32 256, 256
      %2078 = vsyncadd [#allocation3], %s2077
      %s2079 = sshll.u32 [#allocation2], 4
      %s2080 = int_to_ptr.vmem [resolvable:$true] %s2079
      %2085 = dma.vmem_to_hbm [thread:$0]  %s2080, 256, %s11, [#allocation3], 128, 128, 8
    $region49: #{tpu_custom_call.1} parent=1 // pred_fallthru
      _
    // Predicated region
    $region50: #{tpu_custom_call.1} parent=1 // pred_check
      _
    $region51: #{tpu_custom_call.1} parent=1 // pred_check_branch
      %2087 = sbr.rel (0) target = $region53
    $region52: #{tpu_custom_call.1} parent=1 // pred_region
      %2088 = dma.done [#allocation3], 256
    $region53: #{tpu_custom_call.1} parent=1 // pred_fallthru
      _
    %2089 = vsyncpa [#allocation3], 1

</llo_original>
